<compile_context>
chip_gen: v6e
topology: v6e:2x2x1
jax: 0.10.0
libtpu: 0.0.40
codegen_flags: <defaults>
</compile_context>

<pallas_src>
import math

import jax
import jax.numpy as jnp
import numpy as np
from jax import lax
from jax.experimental import pallas as pl
from jax.experimental.pallas import tpu as pltpu


def mhfa_kernel(wk_ref, wv_ref,                      # scalar-prefetch (SMEM): softmaxed layer weights (L,)
                x_ref,                               # (L, T, D) VMEM, bf16 (per-batch slab)
                Wk_ref, bk_ref, Wv_ref, bv_ref,      # (D, C) bf16, (1, C) f32
                Wa_ref, ba_ref,                      # (C, H) bf16, (1, H) f32
                pooled_ref,                          # (H, C) f32 output block
                kbf_ref, vbf_ref):                   # (T, D) bf16 VMEM scratch
    L, T, D = x_ref.shape

    # --- layer-weighted sum over `layers`, tiled over T so accumulators stay in vregs ---
    # x arrives bf16 (halved HBM traffic); per-tile, upcast each layer slice and
    # accumulate in f32 on the VPU (v5e has no bf16 VALU), then store the bf16-cast
    # result ONCE per tile.  16-row tiles keep the bf16 scratch stores aligned to the
    # packed (16, 128) bf16 VMEM tiles; drop to 8 rows at D=1024 if regalloc spills.
    if T % 16 == 0:
        TT = 16
    elif T % 8 == 0:
        TT = 8
    else:
        TT = T
    # TODO(synk): at production T (e.g. ~300, not a multiple of 8) switch this static
    #             unrolled tile loop to pl.loop with pl.ds/pl.multiple_of row offsets.
    for r in range(0, T, TT):
        rows = pl.ds(r, TT)
        x0 = x_ref[0, rows, :].astype(jnp.float32)            # (TT, D)
        k_acc = x0 * wk_ref[0]                                # scalars from SMEM
        v_acc = x0 * wv_ref[0]
        for l in range(1, L):                                 # L is a static Python int
            xl = x_ref[l, rows, :].astype(jnp.float32)
            k_acc = k_acc + xl * wk_ref[l]
            v_acc = v_acc + xl * wv_ref[l]
        kbf_ref[rows, :] = k_acc.astype(jnp.bfloat16)         # single bf16 store per tile
        vbf_ref[rows, :] = v_acc.astype(jnp.bfloat16)

    # --- compression linears: bf16 operands, f32 accumulation on the MXU ---
    k = jnp.dot(kbf_ref[...], Wk_ref[...],
                preferred_element_type=jnp.float32) + bk_ref[...]       # (T, C) f32
    v = jnp.dot(vbf_ref[...], Wv_ref[...],
                preferred_element_type=jnp.float32) + bv_ref[...]       # (T, C) f32

    # --- attention logits + softmax over time (sublane axis), f32 ---
    att = jnp.dot(k.astype(jnp.bfloat16), Wa_ref[...],
                  preferred_element_type=jnp.float32) + ba_ref[...]     # (T, H) f32
    att = att - jnp.max(att, axis=0, keepdims=True)
    att = jnp.exp(att)
    # divide -> EUP reciprocal (VPU slots are loaded by the layer sum)
    att = att * pl.reciprocal(jnp.sum(att, axis=0, keepdims=True), approx=True)

    # --- attention pooling as ONE MXU contraction: pooled[h,c] = sum_t att[t,h] * v[t,c] ---
    pooled = lax.dot_general(att.astype(jnp.bfloat16), v.astype(jnp.bfloat16),
                             (((0,), (0,)), ((), ())),
                             preferred_element_type=jnp.float32)        # (H, C) f32
    pooled_ref[...] = pooled.astype(pooled_ref.dtype)


def _mhfa_call(B, L, T, D, C, H, *, single_buffer_weights):
    """Builds the pallas_call. Constant-weight specs are single-buffered when requested
    (their index maps never change across the grid, so double buffers are pure VMEM waste)."""
    if single_buffer_weights:
        def wspec(shape):
            return pl.BlockSpec(shape, lambda b, wk, wv: (0,) * len(shape),
                                pipeline_mode=pl.Buffered(1))
    else:
        def wspec(shape):
            return pl.BlockSpec(shape, lambda b, wk, wv: (0,) * len(shape))

    grid_spec = pltpu.PrefetchScalarGridSpec(
        num_scalar_prefetch=2,            # wk_soft, wv_soft land in SMEM
        grid=(B,),
        in_specs=[
            pl.BlockSpec((None, L, T, D), lambda b, wk, wv: (b, 0, 0, 0)),  # x slab (double-buffered)
            wspec((D, C)), wspec((1, C)),                                   # Wk, bk
            wspec((D, C)), wspec((1, C)),                                   # Wv, bv
            wspec((C, H)), wspec((1, H)),                                   # Wa, ba
        ],
        out_specs=pl.BlockSpec((None, H, C), lambda b, wk, wv: (b, 0, 0)),
        scratch_shapes=[pltpu.VMEM((T, D), jnp.bfloat16),   # bf16 layer-mixed k (feeds MXU)
                        pltpu.VMEM((T, D), jnp.bfloat16)],  # bf16 layer-mixed v
    )
    return pl.pallas_call(
        mhfa_kernel,
        out_shape=jax.ShapeDtypeStruct((B, H, C), jnp.float32),
        grid_spec=grid_spec,
        compiler_params=pltpu.CompilerParams(
            dimension_semantics=("parallel",),          # batch axis shards across v7x's 2 TCs
            vmem_limit_bytes=32 * 1024 * 1024),         # raise above v5e's 16 MiB scoped default
    )


def mhfa_forward(x, params, *, head_nb, compression_dim, outputs_dim):
    """x: (B, D, T, L) in the PyTorch layout; returns (B, outputs_dim)."""
    B, D, T, L = x.shape
    C, H, O = compression_dim, head_nb, outputs_dim

    # Layout transpose with the bf16 downcast fused in (halves the kernel's HBM bytes).
    # TODO(synk): on v5e/v6e (HBM-bound) fold the L reduction into this native-layout pass
    #             (einsum 'bdtl,l->btd' in XLA) or have the producer emit (B, L, T, D) bf16
    #             directly, eliminating this extra pass over x entirely.
    x_ltd = jnp.transpose(x, (0, 3, 2, 1)).astype(jnp.bfloat16)        # (B, L, T, D) bf16

    # Softmax over the L layer-mixing scalars (scalar-only op, no vector payload worth a kernel).
    wk_soft = jax.nn.softmax(params["weights_k"]).astype(jnp.float32)  # (L,)
    wv_soft = jax.nn.softmax(params["weights_v"]).astype(jnp.float32)  # (L,)

    # Weights pre-transposed to (in, out) and pre-cast to bf16 (MXU operands); biases f32.
    Wk = params["Wk"].T.astype(jnp.bfloat16)                           # (D, C)
    bk = params["bk"][None, :].astype(jnp.float32)                     # (1, C)
    Wv = params["Wv"].T.astype(jnp.bfloat16)                           # (D, C)
    bv = params["bv"][None, :].astype(jnp.float32)                     # (1, C)
    Wa = params["Wa"].T.astype(jnp.bfloat16)                           # (C, H)
    ba = params["ba"][None, :].astype(jnp.float32)                     # (1, H)

    args = (wk_soft, wv_soft, x_ltd, Wk, bk, Wv, bv, Wa, ba)
    # TODO(synk): for production shapes (L=25, T~300, D=1024) add an L (or T) grid reduction
    #             axis with (T, D) f32 VMEM accumulators so each streamed x block is a few
    #             MiB (fits v7x's 64 MiB and v5e's scoped VMEM with deep double-buffering);
    #             on v7x additionally consider folding the layer reduce onto the MXU via
    #             kron(w_soft, W) (L*D, C) weights.
    try:
        pooled = _mhfa_call(B, L, T, D, C, H, single_buffer_weights=True)(*args)
    except Exception:
        # pipeline_mode=pl.Buffered(1) is a pure VMEM-headroom hint; fall back to the default
        # double-buffered weight specs if this JAX/Mosaic build rejects it.
        pooled = _mhfa_call(B, L, T, D, C, H, single_buffer_weights=False)(*args)

    # Final projection hoisted out of the kernel (per review): one batched (B, H*C) x (H*C, O)
    # matmul in XLA with a full MXU M dimension; the H-major flatten of (B, H, C) matches the
    # PyTorch pooling_fc weight layout.
    pooled_flat = pooled.reshape(B, H * C)                             # (B, H*C) f32
    return pooled_flat @ params["Wp"].T + params["bp"]                 # (B, O)


def mhfa_reference(x, params):
    """Pure-JAX f32 reference mirroring the PyTorch forward."""
    wk = jax.nn.softmax(params["weights_k"])
    wv = jax.nn.softmax(params["weights_v"])
    k = jnp.einsum("bdtl,l->btd", x, wk)
    v = jnp.einsum("bdtl,l->btd", x, wv)
    k = k @ params["Wk"].T + params["bk"]
    v = v @ params["Wv"].T + params["bv"]
    att = k @ params["Wa"].T + params["ba"]            # (B, T, H)
    att = jax.nn.softmax(att, axis=1)                  # softmax over T
    pooled = jnp.einsum("bth,btc->bhc", att, v)        # (B, H, C)
    B = x.shape[0]
    pooled = pooled.reshape(B, -1)
    return pooled @ params["Wp"].T + params["bp"]


def init_params(key, *, layers, inputs_dim, compression_dim, head_nb, outputs_dim):
    def linear_init(k, in_f, out_f):
        kw, kb = jax.random.split(k)
        bound = 1.0 / math.sqrt(in_f)
        W = jax.random.uniform(kw, (out_f, in_f), jnp.float32, -bound, bound)
        b = jax.random.uniform(kb, (out_f,), jnp.float32, -bound, bound)
        return W, b

    k1, k2, k3, k4 = jax.random.split(key, 4)
    Wk, bk = linear_init(k1, inputs_dim, compression_dim)
    Wv, bv = linear_init(k2, inputs_dim, compression_dim)
    Wa, ba = linear_init(k3, compression_dim, head_nb)
    Wp, bp = linear_init(k4, head_nb * compression_dim, outputs_dim)
    return {
        "weights_k": jnp.ones((layers,), jnp.float32),
        "weights_v": jnp.ones((layers,), jnp.float32),
        "Wk": Wk, "bk": bk, "Wv": Wv, "bv": bv,
        "Wa": Wa, "ba": ba, "Wp": Wp, "bp": bp,
    }


if __name__ == "__main__":
    # Small, module-consistent shapes (T=32 exercises the multi-tile layer-sum path).
    B, D, T, L = 2, 32, 32, 4          # batch, inputs_dim, time, layers
    H, C, O = 4, 16, 8                 # head_nb, compression_dim, outputs_dim

    key = jax.random.PRNGKey(0)
    kx, kp = jax.random.split(key)
    x = jax.random.normal(kx, (B, D, T, L), jnp.float32)   # PyTorch layout (B, D, T, L)
    params = init_params(kp, layers=L, inputs_dim=D, compression_dim=C,
                         head_nb=H, outputs_dim=O)

    out = mhfa_forward(x, params, head_nb=H, compression_dim=C, outputs_dim=O)
    out = jax.block_until_ready(out)

    ref = jax.block_until_ready(mhfa_reference(x, params))
    assert out.shape == (B, O)
    # bf16 x stream + bf16 MXU operands with f32 accumulation -> relaxed tolerance.
    np.testing.assert_allclose(np.asarray(out), np.asarray(ref), rtol=2e-2, atol=2e-2)
    print("KERNEL_OK")
</pallas_src>

<mosaic_0001>
module attributes {stable_mosaic.version = 11 : i64} {
  func.func @mhfa_kernel(%arg0: i32, %arg1: memref<4xf32, #tpu.memory_space<smem>>, %arg2: memref<4xf32, #tpu.memory_space<smem>>, %arg3: memref<1x4x32x32xbf16, #tpu.memory_space<vmem>>, %arg4: memref<32x16xbf16, #tpu.memory_space<vmem>>, %arg5: memref<1x16xf32, #tpu.memory_space<vmem>>, %arg6: memref<32x16xbf16, #tpu.memory_space<vmem>>, %arg7: memref<1x16xf32, #tpu.memory_space<vmem>>, %arg8: memref<16x4xbf16, #tpu.memory_space<vmem>>, %arg9: memref<1x4xf32, #tpu.memory_space<vmem>>, %arg10: memref<1x4x16xf32, #tpu.memory_space<vmem>>, %arg11: memref<32x32xbf16, #tpu.memory_space<vmem>>, %arg12: memref<32x32xbf16, #tpu.memory_space<vmem>>) attributes {dimension_semantics = [#tpu.dimension_semantics<parallel>], iteration_bounds = array<i64: 2>, scalar_prefetch = 2 : i64, scratch_operands = 2 : i64, tpu.core_type = #tpu.core_type<tc>, window_params = [{transform_indices = @transform_0, window_bounds = array<i64: 1, 4, 32, 32>}, {pipeline_mode = #tpu.pipeline_mode<synchronous>, transform_indices = @transform_1, window_bounds = array<i64: 32, 16>}, {pipeline_mode = #tpu.pipeline_mode<synchronous>, transform_indices = @transform_2, window_bounds = array<i64: 1, 16>}, {pipeline_mode = #tpu.pipeline_mode<synchronous>, transform_indices = @transform_3, window_bounds = array<i64: 32, 16>}, {pipeline_mode = #tpu.pipeline_mode<synchronous>, transform_indices = @transform_4, window_bounds = array<i64: 1, 16>}, {pipeline_mode = #tpu.pipeline_mode<synchronous>, transform_indices = @transform_5, window_bounds = array<i64: 16, 4>}, {pipeline_mode = #tpu.pipeline_mode<synchronous>, transform_indices = @transform_6, window_bounds = array<i64: 1, 4>}, {transform_indices = @transform_7, window_bounds = array<i64: 1, 4, 16>}]} {
    %c0 = arith.constant 0 : index
    %c0_0 = arith.constant 0 : index
    %c0_1 = arith.constant 0 : index
    %c0_2 = arith.constant 0 : index
    %0 = vector.load %arg3[%c0, %c0_0, %c0_1, %c0_2] : memref<1x4x32x32xbf16, #tpu.memory_space<vmem>>, vector<1x1x16x32xbf16>
    %1 = vector.shape_cast %0 : vector<1x1x16x32xbf16> to vector<16x32xbf16>
    %2 = arith.extf %1 : vector<16x32xbf16> to vector<16x32xf32>
    %c0_3 = arith.constant 0 : index
    %3 = memref.load %arg1[%c0_3] : memref<4xf32, #tpu.memory_space<smem>>
    %4 = vector.broadcast %3 : f32 to vector<16x32xf32>
    %5 = arith.mulf %2, %4 : vector<16x32xf32>
    %c0_4 = arith.constant 0 : index
    %6 = memref.load %arg2[%c0_4] : memref<4xf32, #tpu.memory_space<smem>>
    %7 = vector.broadcast %6 : f32 to vector<16x32xf32>
    %8 = arith.mulf %2, %7 : vector<16x32xf32>
    %c0_5 = arith.constant 0 : index
    %c1 = arith.constant 1 : index
    %c0_6 = arith.constant 0 : index
    %c0_7 = arith.constant 0 : index
    %9 = vector.load %arg3[%c0_5, %c1, %c0_6, %c0_7] : memref<1x4x32x32xbf16, #tpu.memory_space<vmem>>, vector<1x1x16x32xbf16>
    %10 = vector.shape_cast %9 : vector<1x1x16x32xbf16> to vector<16x32xbf16>
    %11 = arith.extf %10 : vector<16x32xbf16> to vector<16x32xf32>
    %c1_8 = arith.constant 1 : index
    %12 = memref.load %arg1[%c1_8] : memref<4xf32, #tpu.memory_space<smem>>
    %13 = vector.broadcast %12 : f32 to vector<16x32xf32>
    %14 = arith.mulf %11, %13 : vector<16x32xf32>
    %15 = arith.addf %5, %14 : vector<16x32xf32>
    %c1_9 = arith.constant 1 : index
    %16 = memref.load %arg2[%c1_9] : memref<4xf32, #tpu.memory_space<smem>>
    %17 = vector.broadcast %16 : f32 to vector<16x32xf32>
    %18 = arith.mulf %11, %17 : vector<16x32xf32>
    %19 = arith.addf %8, %18 : vector<16x32xf32>
    %c0_10 = arith.constant 0 : index
    %c2 = arith.constant 2 : index
    %c0_11 = arith.constant 0 : index
    %c0_12 = arith.constant 0 : index
    %20 = vector.load %arg3[%c0_10, %c2, %c0_11, %c0_12] : memref<1x4x32x32xbf16, #tpu.memory_space<vmem>>, vector<1x1x16x32xbf16>
    %21 = vector.shape_cast %20 : vector<1x1x16x32xbf16> to vector<16x32xbf16>
    %22 = arith.extf %21 : vector<16x32xbf16> to vector<16x32xf32>
    %c2_13 = arith.constant 2 : index
    %23 = memref.load %arg1[%c2_13] : memref<4xf32, #tpu.memory_space<smem>>
    %24 = vector.broadcast %23 : f32 to vector<16x32xf32>
    %25 = arith.mulf %22, %24 : vector<16x32xf32>
    %26 = arith.addf %15, %25 : vector<16x32xf32>
    %c2_14 = arith.constant 2 : index
    %27 = memref.load %arg2[%c2_14] : memref<4xf32, #tpu.memory_space<smem>>
    %28 = vector.broadcast %27 : f32 to vector<16x32xf32>
    %29 = arith.mulf %22, %28 : vector<16x32xf32>
    %30 = arith.addf %19, %29 : vector<16x32xf32>
    %c0_15 = arith.constant 0 : index
    %c3 = arith.constant 3 : index
    %c0_16 = arith.constant 0 : index
    %c0_17 = arith.constant 0 : index
    %31 = vector.load %arg3[%c0_15, %c3, %c0_16, %c0_17] : memref<1x4x32x32xbf16, #tpu.memory_space<vmem>>, vector<1x1x16x32xbf16>
    %32 = vector.shape_cast %31 : vector<1x1x16x32xbf16> to vector<16x32xbf16>
    %33 = arith.extf %32 : vector<16x32xbf16> to vector<16x32xf32>
    %c3_18 = arith.constant 3 : index
    %34 = memref.load %arg1[%c3_18] : memref<4xf32, #tpu.memory_space<smem>>
    %35 = vector.broadcast %34 : f32 to vector<16x32xf32>
    %36 = arith.mulf %33, %35 : vector<16x32xf32>
    %37 = arith.addf %26, %36 : vector<16x32xf32>
    %c3_19 = arith.constant 3 : index
    %38 = memref.load %arg2[%c3_19] : memref<4xf32, #tpu.memory_space<smem>>
    %39 = vector.broadcast %38 : f32 to vector<16x32xf32>
    %40 = arith.mulf %33, %39 : vector<16x32xf32>
    %41 = arith.addf %30, %40 : vector<16x32xf32>
    %42 = arith.truncf %37 : vector<16x32xf32> to vector<16x32xbf16>
    %c0_20 = arith.constant 0 : index
    %c0_21 = arith.constant 0 : index
    %43 = vector.load %arg11[%c0_20, %c0_21] : memref<32x32xbf16, #tpu.memory_space<vmem>>, vector<16x32xbf16>
    tpu.vector_store %arg11[%c0_20, %c0_21], %42 {strides = array<i32>} : memref<32x32xbf16, #tpu.memory_space<vmem>>, vector<16x32xbf16>,
    %44 = arith.truncf %41 : vector<16x32xf32> to vector<16x32xbf16>
    %c0_22 = arith.constant 0 : index
    %c0_23 = arith.constant 0 : index
    %45 = vector.load %arg12[%c0_22, %c0_23] : memref<32x32xbf16, #tpu.memory_space<vmem>>, vector<16x32xbf16>
    tpu.vector_store %arg12[%c0_22, %c0_23], %44 {strides = array<i32>} : memref<32x32xbf16, #tpu.memory_space<vmem>>, vector<16x32xbf16>,
    %c0_24 = arith.constant 0 : index
    %c0_25 = arith.constant 0 : index
    %c16 = arith.constant 16 : index
    %c0_26 = arith.constant 0 : index
    %46 = vector.load %arg3[%c0_24, %c0_25, %c16, %c0_26] : memref<1x4x32x32xbf16, #tpu.memory_space<vmem>>, vector<1x1x16x32xbf16>
    %47 = vector.shape_cast %46 : vector<1x1x16x32xbf16> to vector<16x32xbf16>
    %48 = arith.extf %47 : vector<16x32xbf16> to vector<16x32xf32>
    %c0_27 = arith.constant 0 : index
    %49 = memref.load %arg1[%c0_27] : memref<4xf32, #tpu.memory_space<smem>>
    %50 = vector.broadcast %49 : f32 to vector<16x32xf32>
    %51 = arith.mulf %48, %50 : vector<16x32xf32>
    %c0_28 = arith.constant 0 : index
    %52 = memref.load %arg2[%c0_28] : memref<4xf32, #tpu.memory_space<smem>>
    %53 = vector.broadcast %52 : f32 to vector<16x32xf32>
    %54 = arith.mulf %48, %53 : vector<16x32xf32>
    %c0_29 = arith.constant 0 : index
    %c1_30 = arith.constant 1 : index
    %c16_31 = arith.constant 16 : index
    %c0_32 = arith.constant 0 : index
    %55 = vector.load %arg3[%c0_29, %c1_30, %c16_31, %c0_32] : memref<1x4x32x32xbf16, #tpu.memory_space<vmem>>, vector<1x1x16x32xbf16>
    %56 = vector.shape_cast %55 : vector<1x1x16x32xbf16> to vector<16x32xbf16>
    %57 = arith.extf %56 : vector<16x32xbf16> to vector<16x32xf32>
    %c1_33 = arith.constant 1 : index
    %58 = memref.load %arg1[%c1_33] : memref<4xf32, #tpu.memory_space<smem>>
    %59 = vector.broadcast %58 : f32 to vector<16x32xf32>
    %60 = arith.mulf %57, %59 : vector<16x32xf32>
    %61 = arith.addf %51, %60 : vector<16x32xf32>
    %c1_34 = arith.constant 1 : index
    %62 = memref.load %arg2[%c1_34] : memref<4xf32, #tpu.memory_space<smem>>
    %63 = vector.broadcast %62 : f32 to vector<16x32xf32>
    %64 = arith.mulf %57, %63 : vector<16x32xf32>
    %65 = arith.addf %54, %64 : vector<16x32xf32>
    %c0_35 = arith.constant 0 : index
    %c2_36 = arith.constant 2 : index
    %c16_37 = arith.constant 16 : index
    %c0_38 = arith.constant 0 : index
    %66 = vector.load %arg3[%c0_35, %c2_36, %c16_37, %c0_38] : memref<1x4x32x32xbf16, #tpu.memory_space<vmem>>, vector<1x1x16x32xbf16>
    %67 = vector.shape_cast %66 : vector<1x1x16x32xbf16> to vector<16x32xbf16>
    %68 = arith.extf %67 : vector<16x32xbf16> to vector<16x32xf32>
    %c2_39 = arith.constant 2 : index
    %69 = memref.load %arg1[%c2_39] : memref<4xf32, #tpu.memory_space<smem>>
    %70 = vector.broadcast %69 : f32 to vector<16x32xf32>
    %71 = arith.mulf %68, %70 : vector<16x32xf32>
    %72 = arith.addf %61, %71 : vector<16x32xf32>
    %c2_40 = arith.constant 2 : index
    %73 = memref.load %arg2[%c2_40] : memref<4xf32, #tpu.memory_space<smem>>
    %74 = vector.broadcast %73 : f32 to vector<16x32xf32>
    %75 = arith.mulf %68, %74 : vector<16x32xf32>
    %76 = arith.addf %65, %75 : vector<16x32xf32>
    %c0_41 = arith.constant 0 : index
    %c3_42 = arith.constant 3 : index
    %c16_43 = arith.constant 16 : index
    %c0_44 = arith.constant 0 : index
    %77 = vector.load %arg3[%c0_41, %c3_42, %c16_43, %c0_44] : memref<1x4x32x32xbf16, #tpu.memory_space<vmem>>, vector<1x1x16x32xbf16>
    %78 = vector.shape_cast %77 : vector<1x1x16x32xbf16> to vector<16x32xbf16>
    %79 = arith.extf %78 : vector<16x32xbf16> to vector<16x32xf32>
    %c3_45 = arith.constant 3 : index
    %80 = memref.load %arg1[%c3_45] : memref<4xf32, #tpu.memory_space<smem>>
    %81 = vector.broadcast %80 : f32 to vector<16x32xf32>
    %82 = arith.mulf %79, %81 : vector<16x32xf32>
    %83 = arith.addf %72, %82 : vector<16x32xf32>
    %c3_46 = arith.constant 3 : index
    %84 = memref.load %arg2[%c3_46] : memref<4xf32, #tpu.memory_space<smem>>
    %85 = vector.broadcast %84 : f32 to vector<16x32xf32>
    %86 = arith.mulf %79, %85 : vector<16x32xf32>
    %87 = arith.addf %76, %86 : vector<16x32xf32>
    %88 = arith.truncf %83 : vector<16x32xf32> to vector<16x32xbf16>
    %c16_47 = arith.constant 16 : index
    %c0_48 = arith.constant 0 : index
    %89 = vector.load %arg11[%c16_47, %c0_48] : memref<32x32xbf16, #tpu.memory_space<vmem>>, vector<16x32xbf16>
    tpu.vector_store %arg11[%c16_47, %c0_48], %88 {strides = array<i32>} : memref<32x32xbf16, #tpu.memory_space<vmem>>, vector<16x32xbf16>,
    %90 = arith.truncf %87 : vector<16x32xf32> to vector<16x32xbf16>
    %c16_49 = arith.constant 16 : index
    %c0_50 = arith.constant 0 : index
    %91 = vector.load %arg12[%c16_49, %c0_50] : memref<32x32xbf16, #tpu.memory_space<vmem>>, vector<16x32xbf16>
    tpu.vector_store %arg12[%c16_49, %c0_50], %90 {strides = array<i32>} : memref<32x32xbf16, #tpu.memory_space<vmem>>, vector<16x32xbf16>,
    %c0_51 = arith.constant 0 : index
    %c0_52 = arith.constant 0 : index
    %92 = vector.load %arg11[%c0_51, %c0_52] : memref<32x32xbf16, #tpu.memory_space<vmem>>, vector<32x32xbf16>
    %c0_53 = arith.constant 0 : index
    %c0_54 = arith.constant 0 : index
    %93 = vector.load %arg4[%c0_53, %c0_54] : memref<32x16xbf16, #tpu.memory_space<vmem>>, vector<32x16xbf16>
    %cst = arith.constant dense<0.000000e+00> : vector<32x16xf32>
    %94 = tpu.matmul %92, %93, %cst {dimension_numbers = #tpu.dot_dimension_numbers<[1], [0], [0], [1], [0, 0, 1, 1], [], []>} : vector<32x32xbf16>, vector<32x16xbf16>, vector<32x16xf32> -> vector<32x16xf32>
    %c0_55 = arith.constant 0 : index
    %c0_56 = arith.constant 0 : index
    %95 = vector.load %arg5[%c0_55, %c0_56] : memref<1x16xf32, #tpu.memory_space<vmem>>, vector<1x16xf32>
    %96 = vector.broadcast %95 : vector<1x16xf32> to vector<32x16xf32>
    %97 = arith.addf %94, %96 : vector<32x16xf32>
    %c0_57 = arith.constant 0 : index
    %c0_58 = arith.constant 0 : index
    %98 = vector.load %arg12[%c0_57, %c0_58] : memref<32x32xbf16, #tpu.memory_space<vmem>>, vector<32x32xbf16>
    %c0_59 = arith.constant 0 : index
    %c0_60 = arith.constant 0 : index
    %99 = vector.load %arg6[%c0_59, %c0_60] : memref<32x16xbf16, #tpu.memory_space<vmem>>, vector<32x16xbf16>
    %cst_61 = arith.constant dense<0.000000e+00> : vector<32x16xf32>
    %100 = tpu.matmul %98, %99, %cst_61 {dimension_numbers = #tpu.dot_dimension_numbers<[1], [0], [0], [1], [0, 0, 1, 1], [], []>} : vector<32x32xbf16>, vector<32x16xbf16>, vector<32x16xf32> -> vector<32x16xf32>
    %c0_62 = arith.constant 0 : index
    %c0_63 = arith.constant 0 : index
    %101 = vector.load %arg7[%c0_62, %c0_63] : memref<1x16xf32, #tpu.memory_space<vmem>>, vector<1x16xf32>
    %102 = vector.broadcast %101 : vector<1x16xf32> to vector<32x16xf32>
    %103 = arith.addf %100, %102 : vector<32x16xf32>
    %104 = arith.truncf %97 : vector<32x16xf32> to vector<32x16xbf16>
    %c0_64 = arith.constant 0 : index
    %c0_65 = arith.constant 0 : index
    %105 = vector.load %arg8[%c0_64, %c0_65] : memref<16x4xbf16, #tpu.memory_space<vmem>>, vector<16x4xbf16>
    %cst_66 = arith.constant dense<0.000000e+00> : vector<32x4xf32>
    %106 = tpu.matmul %104, %105, %cst_66 {dimension_numbers = #tpu.dot_dimension_numbers<[1], [0], [0], [1], [0, 0, 1, 1], [], []>} : vector<32x16xbf16>, vector<16x4xbf16>, vector<32x4xf32> -> vector<32x4xf32>
    %c0_67 = arith.constant 0 : index
    %c0_68 = arith.constant 0 : index
    %107 = vector.load %arg9[%c0_67, %c0_68] : memref<1x4xf32, #tpu.memory_space<vmem>>, vector<1x4xf32>
    %108 = vector.broadcast %107 : vector<1x4xf32> to vector<32x4xf32>
    %109 = arith.addf %106, %108 : vector<32x4xf32>
    %cst_69 = arith.constant dense<0xFF800000> : vector<4xf32>
    %110 = vector.multi_reduction <maximumf>, %109, %cst_69 [0] : vector<32x4xf32> to vector<4xf32>
    %111 = vector.shape_cast %110 : vector<4xf32> to vector<1x4xf32>
    %112 = vector.broadcast %111 : vector<1x4xf32> to vector<32x4xf32>
    %113 = arith.subf %109, %112 : vector<32x4xf32>
    %114 = math.exp %113 : vector<32x4xf32>
    %cst_70 = arith.constant dense<0.000000e+00> : vector<4xf32>
    %115 = vector.multi_reduction <add>, %114, %cst_70 [0] : vector<32x4xf32> to vector<4xf32>
    %116 = vector.shape_cast %115 : vector<4xf32> to vector<1x4xf32>
    %117 = tpu.reciprocal %116 {approx = true} : vector<1x4xf32> -> vector<1x4xf32>
    %118 = vector.broadcast %117 : vector<1x4xf32> to vector<32x4xf32>
    %119 = arith.mulf %114, %118 : vector<32x4xf32>
    %120 = arith.truncf %119 : vector<32x4xf32> to vector<32x4xbf16>
    %121 = arith.truncf %103 : vector<32x16xf32> to vector<32x16xbf16>
    %cst_71 = arith.constant dense<0.000000e+00> : vector<4x16xf32>
    %122 = tpu.matmul %120, %121, %cst_71 {dimension_numbers = #tpu.dot_dimension_numbers<[0], [0], [1], [1], [0, 1, 1, 1], [], []>} : vector<32x4xbf16>, vector<32x16xbf16>, vector<4x16xf32> -> vector<4x16xf32>
    %c0_72 = arith.constant 0 : index
    %c0_73 = arith.constant 0 : index
    %c0_74 = arith.constant 0 : index
    %123 = vector.load %arg10[%c0_72, %c0_73, %c0_74] : memref<1x4x16xf32, #tpu.memory_space<vmem>>, vector<1x4x16xf32>
    %124 = vector.shape_cast %123 : vector<1x4x16xf32> to vector<4x16xf32>
    %125 = vector.shape_cast %122 : vector<4x16xf32> to vector<1x4x16xf32>
    tpu.vector_store %arg10[%c0_72, %c0_73, %c0_74], %125 {strides = array<i32>} : memref<1x4x16xf32, #tpu.memory_space<vmem>>, vector<1x4x16xf32>,
    return
  }
  func.func @transform_0(%arg0: i32, %arg1: memref<4xf32, #tpu.memory_space<smem>>, %arg2: memref<4xf32, #tpu.memory_space<smem>>) -> (i32, i32, i32, i32) {
    %c0_i32 = arith.constant 0 : i32
    %c0_i32_0 = arith.constant 0 : i32
    %c0_i32_1 = arith.constant 0 : i32
    %c0_i32_2 = arith.constant 0 : i32
    return %arg0, %c0_i32, %c0_i32_0, %c0_i32_1 : i32, i32, i32, i32
  }
  func.func @transform_1(%arg0: i32, %arg1: memref<4xf32, #tpu.memory_space<smem>>, %arg2: memref<4xf32, #tpu.memory_space<smem>>) -> (i32, i32) {
    %c0_i32 = arith.constant 0 : i32
    %c0_i32_0 = arith.constant 0 : i32
    %c0_i32_1 = arith.constant 0 : i32
    return %c0_i32, %c0_i32_0 : i32, i32
  }
  func.func @transform_2(%arg0: i32, %arg1: memref<4xf32, #tpu.memory_space<smem>>, %arg2: memref<4xf32, #tpu.memory_space<smem>>) -> (i32, i32) {
    %c0_i32 = arith.constant 0 : i32
    %c0_i32_0 = arith.constant 0 : i32
    %c0_i32_1 = arith.constant 0 : i32
    return %c0_i32, %c0_i32_0 : i32, i32
  }
  func.func @transform_3(%arg0: i32, %arg1: memref<4xf32, #tpu.memory_space<smem>>, %arg2: memref<4xf32, #tpu.memory_space<smem>>) -> (i32, i32) {
    %c0_i32 = arith.constant 0 : i32
    %c0_i32_0 = arith.constant 0 : i32
    %c0_i32_1 = arith.constant 0 : i32
    return %c0_i32, %c0_i32_0 : i32, i32
  }
  func.func @transform_4(%arg0: i32, %arg1: memref<4xf32, #tpu.memory_space<smem>>, %arg2: memref<4xf32, #tpu.memory_space<smem>>) -> (i32, i32) {
    %c0_i32 = arith.constant 0 : i32
    %c0_i32_0 = arith.constant 0 : i32
    %c0_i32_1 = arith.constant 0 : i32
    return %c0_i32, %c0_i32_0 : i32, i32
  }
  func.func @transform_5(%arg0: i32, %arg1: memref<4xf32, #tpu.memory_space<smem>>, %arg2: memref<4xf32, #tpu.memory_space<smem>>) -> (i32, i32) {
    %c0_i32 = arith.constant 0 : i32
    %c0_i32_0 = arith.constant 0 : i32
    %c0_i32_1 = arith.constant 0 : i32
    return %c0_i32, %c0_i32_0 : i32, i32
  }
  func.func @transform_6(%arg0: i32, %arg1: memref<4xf32, #tpu.memory_space<smem>>, %arg2: memref<4xf32, #tpu.memory_space<smem>>) -> (i32, i32) {
    %c0_i32 = arith.constant 0 : i32
    %c0_i32_0 = arith.constant 0 : i32
    %c0_i32_1 = arith.constant 0 : i32
    return %c0_i32, %c0_i32_0 : i32, i32
  }
  func.func @transform_7(%arg0: i32, %arg1: memref<4xf32, #tpu.memory_space<smem>>, %arg2: memref<4xf32, #tpu.memory_space<smem>>) -> (i32, i32, i32) {
    %c0_i32 = arith.constant 0 : i32
    %c0_i32_0 = arith.constant 0 : i32
    %c0_i32_1 = arith.constant 0 : i32
    return %arg0, %c0_i32, %c0_i32_0 : i32, i32, i32
  }
}

module attributes {stable_mosaic.version = 11 : i64} {
  func.func @mhfa_kernel(%arg0: i32, %arg1: memref<4xf32, #tpu.memory_space<smem>>, %arg2: memref<4xf32, #tpu.memory_space<smem>>, %arg3: memref<1x4x32x32xbf16, #tpu.memory_space<vmem>>, %arg4: memref<32x16xbf16, #tpu.memory_space<vmem>>, %arg5: memref<1x16xf32, #tpu.memory_space<vmem>>, %arg6: memref<32x16xbf16, #tpu.memory_space<vmem>>, %arg7: memref<1x16xf32, #tpu.memory_space<vmem>>, %arg8: memref<16x4xbf16, #tpu.memory_space<vmem>>, %arg9: memref<1x4xf32, #tpu.memory_space<vmem>>, %arg10: memref<1x4x16xf32, #tpu.memory_space<vmem>>, %arg11: memref<32x32xbf16, #tpu.memory_space<vmem>>, %arg12: memref<32x32xbf16, #tpu.memory_space<vmem>>) attributes {dimension_semantics = [#tpu.dimension_semantics<parallel>], iteration_bounds = array<i64: 2>, scalar_prefetch = 2 : i64, scratch_operands = 2 : i64, tpu.core_type = #tpu.core_type<tc>, window_params = [{transform_indices = @transform_0, window_bounds = array<i64: 1, 4, 32, 32>}, {pipeline_mode = #tpu.pipeline_mode<synchronous>, transform_indices = @transform_1, window_bounds = array<i64: 32, 16>}, {pipeline_mode = #tpu.pipeline_mode<synchronous>, transform_indices = @transform_2, window_bounds = array<i64: 1, 16>}, {pipeline_mode = #tpu.pipeline_mode<synchronous>, transform_indices = @transform_3, window_bounds = array<i64: 32, 16>}, {pipeline_mode = #tpu.pipeline_mode<synchronous>, transform_indices = @transform_4, window_bounds = array<i64: 1, 16>}, {pipeline_mode = #tpu.pipeline_mode<synchronous>, transform_indices = @transform_5, window_bounds = array<i64: 16, 4>}, {pipeline_mode = #tpu.pipeline_mode<synchronous>, transform_indices = @transform_6, window_bounds = array<i64: 1, 4>}, {transform_indices = @transform_7, window_bounds = array<i64: 1, 4, 16>}]} {
    %c0 = arith.constant 0 : index
    %c0_0 = arith.constant 0 : index
    %c0_1 = arith.constant 0 : index
    %c0_2 = arith.constant 0 : index
    %0 = vector.load %arg3[%c0, %c0_0, %c0_1, %c0_2] : memref<1x4x32x32xbf16, #tpu.memory_space<vmem>>, vector<1x1x16x32xbf16>
    %1 = vector.shape_cast %0 : vector<1x1x16x32xbf16> to vector<16x32xbf16>
    %2 = arith.extf %1 : vector<16x32xbf16> to vector<16x32xf32>
    %c0_3 = arith.constant 0 : index
    %3 = memref.load %arg1[%c0_3] : memref<4xf32, #tpu.memory_space<smem>>
    %4 = vector.broadcast %3 : f32 to vector<16x32xf32>
    %5 = arith.mulf %2, %4 : vector<16x32xf32>
    %c0_4 = arith.constant 0 : index
    %6 = memref.load %arg2[%c0_4] : memref<4xf32, #tpu.memory_space<smem>>
    %7 = vector.broadcast %6 : f32 to vector<16x32xf32>
    %8 = arith.mulf %2, %7 : vector<16x32xf32>
    %c0_5 = arith.constant 0 : index
    %c1 = arith.constant 1 : index
    %c0_6 = arith.constant 0 : index
    %c0_7 = arith.constant 0 : index
    %9 = vector.load %arg3[%c0_5, %c1, %c0_6, %c0_7] : memref<1x4x32x32xbf16, #tpu.memory_space<vmem>>, vector<1x1x16x32xbf16>
    %10 = vector.shape_cast %9 : vector<1x1x16x32xbf16> to vector<16x32xbf16>
    %11 = arith.extf %10 : vector<16x32xbf16> to vector<16x32xf32>
    %c1_8 = arith.constant 1 : index
    %12 = memref.load %arg1[%c1_8] : memref<4xf32, #tpu.memory_space<smem>>
    %13 = vector.broadcast %12 : f32 to vector<16x32xf32>
    %14 = arith.mulf %11, %13 : vector<16x32xf32>
    %15 = arith.addf %5, %14 : vector<16x32xf32>
    %c1_9 = arith.constant 1 : index
    %16 = memref.load %arg2[%c1_9] : memref<4xf32, #tpu.memory_space<smem>>
    %17 = vector.broadcast %16 : f32 to vector<16x32xf32>
    %18 = arith.mulf %11, %17 : vector<16x32xf32>
    %19 = arith.addf %8, %18 : vector<16x32xf32>
    %c0_10 = arith.constant 0 : index
    %c2 = arith.constant 2 : index
    %c0_11 = arith.constant 0 : index
    %c0_12 = arith.constant 0 : index
    %20 = vector.load %arg3[%c0_10, %c2, %c0_11, %c0_12] : memref<1x4x32x32xbf16, #tpu.memory_space<vmem>>, vector<1x1x16x32xbf16>
    %21 = vector.shape_cast %20 : vector<1x1x16x32xbf16> to vector<16x32xbf16>
    %22 = arith.extf %21 : vector<16x32xbf16> to vector<16x32xf32>
    %c2_13 = arith.constant 2 : index
    %23 = memref.load %arg1[%c2_13] : memref<4xf32, #tpu.memory_space<smem>>
    %24 = vector.broadcast %23 : f32 to vector<16x32xf32>
    %25 = arith.mulf %22, %24 : vector<16x32xf32>
    %26 = arith.addf %15, %25 : vector<16x32xf32>
    %c2_14 = arith.constant 2 : index
    %27 = memref.load %arg2[%c2_14] : memref<4xf32, #tpu.memory_space<smem>>
    %28 = vector.broadcast %27 : f32 to vector<16x32xf32>
    %29 = arith.mulf %22, %28 : vector<16x32xf32>
    %30 = arith.addf %19, %29 : vector<16x32xf32>
    %c0_15 = arith.constant 0 : index
    %c3 = arith.constant 3 : index
    %c0_16 = arith.constant 0 : index
    %c0_17 = arith.constant 0 : index
    %31 = vector.load %arg3[%c0_15, %c3, %c0_16, %c0_17] : memref<1x4x32x32xbf16, #tpu.memory_space<vmem>>, vector<1x1x16x32xbf16>
    %32 = vector.shape_cast %31 : vector<1x1x16x32xbf16> to vector<16x32xbf16>
    %33 = arith.extf %32 : vector<16x32xbf16> to vector<16x32xf32>
    %c3_18 = arith.constant 3 : index
    %34 = memref.load %arg1[%c3_18] : memref<4xf32, #tpu.memory_space<smem>>
    %35 = vector.broadcast %34 : f32 to vector<16x32xf32>
    %36 = arith.mulf %33, %35 : vector<16x32xf32>
    %37 = arith.addf %26, %36 : vector<16x32xf32>
    %c3_19 = arith.constant 3 : index
    %38 = memref.load %arg2[%c3_19] : memref<4xf32, #tpu.memory_space<smem>>
    %39 = vector.broadcast %38 : f32 to vector<16x32xf32>
    %40 = arith.mulf %33, %39 : vector<16x32xf32>
    %41 = arith.addf %30, %40 : vector<16x32xf32>
    %42 = arith.truncf %37 : vector<16x32xf32> to vector<16x32xbf16>
    %c0_20 = arith.constant 0 : index
    %c0_21 = arith.constant 0 : index
    %43 = vector.load %arg11[%c0_20, %c0_21] : memref<32x32xbf16, #tpu.memory_space<vmem>>, vector<16x32xbf16>
    tpu.vector_store %arg11[%c0_20, %c0_21], %42 {strides = array<i32>} : memref<32x32xbf16, #tpu.memory_space<vmem>>, vector<16x32xbf16>,
    %44 = arith.truncf %41 : vector<16x32xf32> to vector<16x32xbf16>
    %c0_22 = arith.constant 0 : index
    %c0_23 = arith.constant 0 : index
    %45 = vector.load %arg12[%c0_22, %c0_23] : memref<32x32xbf16, #tpu.memory_space<vmem>>, vector<16x32xbf16>
    tpu.vector_store %arg12[%c0_22, %c0_23], %44 {strides = array<i32>} : memref<32x32xbf16, #tpu.memory_space<vmem>>, vector<16x32xbf16>,
    %c0_24 = arith.constant 0 : index
    %c0_25 = arith.constant 0 : index
    %c16 = arith.constant 16 : index
    %c0_26 = arith.constant 0 : index
    %46 = vector.load %arg3[%c0_24, %c0_25, %c16, %c0_26] : memref<1x4x32x32xbf16, #tpu.memory_space<vmem>>, vector<1x1x16x32xbf16>
    %47 = vector.shape_cast %46 : vector<1x1x16x32xbf16> to vector<16x32xbf16>
    %48 = arith.extf %47 : vector<16x32xbf16> to vector<16x32xf32>
    %c0_27 = arith.constant 0 : index
    %49 = memref.load %arg1[%c0_27] : memref<4xf32, #tpu.memory_space<smem>>
    %50 = vector.broadcast %49 : f32 to vector<16x32xf32>
    %51 = arith.mulf %48, %50 : vector<16x32xf32>
    %c0_28 = arith.constant 0 : index
    %52 = memref.load %arg2[%c0_28] : memref<4xf32, #tpu.memory_space<smem>>
    %53 = vector.broadcast %52 : f32 to vector<16x32xf32>
    %54 = arith.mulf %48, %53 : vector<16x32xf32>
    %c0_29 = arith.constant 0 : index
    %c1_30 = arith.constant 1 : index
    %c16_31 = arith.constant 16 : index
    %c0_32 = arith.constant 0 : index
    %55 = vector.load %arg3[%c0_29, %c1_30, %c16_31, %c0_32] : memref<1x4x32x32xbf16, #tpu.memory_space<vmem>>, vector<1x1x16x32xbf16>
    %56 = vector.shape_cast %55 : vector<1x1x16x32xbf16> to vector<16x32xbf16>
    %57 = arith.extf %56 : vector<16x32xbf16> to vector<16x32xf32>
    %c1_33 = arith.constant 1 : index
    %58 = memref.load %arg1[%c1_33] : memref<4xf32, #tpu.memory_space<smem>>
    %59 = vector.broadcast %58 : f32 to vector<16x32xf32>
    %60 = arith.mulf %57, %59 : vector<16x32xf32>
    %61 = arith.addf %51, %60 : vector<16x32xf32>
    %c1_34 = arith.constant 1 : index
    %62 = memref.load %arg2[%c1_34] : memref<4xf32, #tpu.memory_space<smem>>
    %63 = vector.broadcast %62 : f32 to vector<16x32xf32>
    %64 = arith.mulf %57, %63 : vector<16x32xf32>
    %65 = arith.addf %54, %64 : vector<16x32xf32>
    %c0_35 = arith.constant 0 : index
    %c2_36 = arith.constant 2 : index
    %c16_37 = arith.constant 16 : index
    %c0_38 = arith.constant 0 : index
    %66 = vector.load %arg3[%c0_35, %c2_36, %c16_37, %c0_38] : memref<1x4x32x32xbf16, #tpu.memory_space<vmem>>, vector<1x1x16x32xbf16>
    %67 = vector.shape_cast %66 : vector<1x1x16x32xbf16> to vector<16x32xbf16>
    %68 = arith.extf %67 : vector<16x32xbf16> to vector<16x32xf32>
    %c2_39 = arith.constant 2 : index
    %69 = memref.load %arg1[%c2_39] : memref<4xf32, #tpu.memory_space<smem>>
    %70 = vector.broadcast %69 : f32 to vector<16x32xf32>
    %71 = arith.mulf %68, %70 : vector<16x32xf32>
    %72 = arith.addf %61, %71 : vector<16x32xf32>
    %c2_40 = arith.constant 2 : index
    %73 = memref.load %arg2[%c2_40] : memref<4xf32, #tpu.memory_space<smem>>
    %74 = vector.broadcast %73 : f32 to vector<16x32xf32>
    %75 = arith.mulf %68, %74 : vector<16x32xf32>
    %76 = arith.addf %65, %75 : vector<16x32xf32>
    %c0_41 = arith.constant 0 : index
    %c3_42 = arith.constant 3 : index
    %c16_43 = arith.constant 16 : index
    %c0_44 = arith.constant 0 : index
    %77 = vector.load %arg3[%c0_41, %c3_42, %c16_43, %c0_44] : memref<1x4x32x32xbf16, #tpu.memory_space<vmem>>, vector<1x1x16x32xbf16>
    %78 = vector.shape_cast %77 : vector<1x1x16x32xbf16> to vector<16x32xbf16>
    %79 = arith.extf %78 : vector<16x32xbf16> to vector<16x32xf32>
    %c3_45 = arith.constant 3 : index
    %80 = memref.load %arg1[%c3_45] : memref<4xf32, #tpu.memory_space<smem>>
    %81 = vector.broadcast %80 : f32 to vector<16x32xf32>
    %82 = arith.mulf %79, %81 : vector<16x32xf32>
    %83 = arith.addf %72, %82 : vector<16x32xf32>
    %c3_46 = arith.constant 3 : index
    %84 = memref.load %arg2[%c3_46] : memref<4xf32, #tpu.memory_space<smem>>
    %85 = vector.broadcast %84 : f32 to vector<16x32xf32>
    %86 = arith.mulf %79, %85 : vector<16x32xf32>
    %87 = arith.addf %76, %86 : vector<16x32xf32>
    %88 = arith.truncf %83 : vector<16x32xf32> to vector<16x32xbf16>
    %c16_47 = arith.constant 16 : index
    %c0_48 = arith.constant 0 : index
    %89 = vector.load %arg11[%c16_47, %c0_48] : memref<32x32xbf16, #tpu.memory_space<vmem>>, vector<16x32xbf16>
    tpu.vector_store %arg11[%c16_47, %c0_48], %88 {strides = array<i32>} : memref<32x32xbf16, #tpu.memory_space<vmem>>, vector<16x32xbf16>,
    %90 = arith.truncf %87 : vector<16x32xf32> to vector<16x32xbf16>
    %c16_49 = arith.constant 16 : index
    %c0_50 = arith.constant 0 : index
    %91 = vector.load %arg12[%c16_49, %c0_50] : memref<32x32xbf16, #tpu.memory_space<vmem>>, vector<16x32xbf16>
    tpu.vector_store %arg12[%c16_49, %c0_50], %90 {strides = array<i32>} : memref<32x32xbf16, #tpu.memory_space<vmem>>, vector<16x32xbf16>,
    %c0_51 = arith.constant 0 : index
    %c0_52 = arith.constant 0 : index
    %92 = vector.load %arg11[%c0_51, %c0_52] : memref<32x32xbf16, #tpu.memory_space<vmem>>, vector<32x32xbf16>
    %c0_53 = arith.constant 0 : index
    %c0_54 = arith.constant 0 : index
    %93 = vector.load %arg4[%c0_53, %c0_54] : memref<32x16xbf16, #tpu.memory_space<vmem>>, vector<32x16xbf16>
    %cst = arith.constant dense<0.000000e+00> : vector<32x16xf32>
    %94 = tpu.matmul %92, %93, %cst {dimension_numbers = #tpu.dot_dimension_numbers<[1], [0], [0], [1], [0, 0, 1, 1], [], []>} : vector<32x32xbf16>, vector<32x16xbf16>, vector<32x16xf32> -> vector<32x16xf32>
    %c0_55 = arith.constant 0 : index
    %c0_56 = arith.constant 0 : index
    %95 = vector.load %arg5[%c0_55, %c0_56] : memref<1x16xf32, #tpu.memory_space<vmem>>, vector<1x16xf32>
    %96 = vector.broadcast %95 : vector<1x16xf32> to vector<32x16xf32>
    %97 = arith.addf %94, %96 : vector<32x16xf32>
    %c0_57 = arith.constant 0 : index
    %c0_58 = arith.constant 0 : index
    %98 = vector.load %arg12[%c0_57, %c0_58] : memref<32x32xbf16, #tpu.memory_space<vmem>>, vector<32x32xbf16>
    %c0_59 = arith.constant 0 : index
    %c0_60 = arith.constant 0 : index
    %99 = vector.load %arg6[%c0_59, %c0_60] : memref<32x16xbf16, #tpu.memory_space<vmem>>, vector<32x16xbf16>
    %cst_61 = arith.constant dense<0.000000e+00> : vector<32x16xf32>
    %100 = tpu.matmul %98, %99, %cst_61 {dimension_numbers = #tpu.dot_dimension_numbers<[1], [0], [0], [1], [0, 0, 1, 1], [], []>} : vector<32x32xbf16>, vector<32x16xbf16>, vector<32x16xf32> -> vector<32x16xf32>
    %c0_62 = arith.constant 0 : index
    %c0_63 = arith.constant 0 : index
    %101 = vector.load %arg7[%c0_62, %c0_63] : memref<1x16xf32, #tpu.memory_space<vmem>>, vector<1x16xf32>
    %102 = vector.broadcast %101 : vector<1x16xf32> to vector<32x16xf32>
    %103 = arith.addf %100, %102 : vector<32x16xf32>
    %104 = arith.truncf %97 : vector<32x16xf32> to vector<32x16xbf16>
    %c0_64 = arith.constant 0 : index
    %c0_65 = arith.constant 0 : index
    %105 = vector.load %arg8[%c0_64, %c0_65] : memref<16x4xbf16, #tpu.memory_space<vmem>>, vector<16x4xbf16>
    %cst_66 = arith.constant dense<0.000000e+00> : vector<32x4xf32>
    %106 = tpu.matmul %104, %105, %cst_66 {dimension_numbers = #tpu.dot_dimension_numbers<[1], [0], [0], [1], [0, 0, 1, 1], [], []>} : vector<32x16xbf16>, vector<16x4xbf16>, vector<32x4xf32> -> vector<32x4xf32>
    %c0_67 = arith.constant 0 : index
    %c0_68 = arith.constant 0 : index
    %107 = vector.load %arg9[%c0_67, %c0_68] : memref<1x4xf32, #tpu.memory_space<vmem>>, vector<1x4xf32>
    %108 = vector.broadcast %107 : vector<1x4xf32> to vector<32x4xf32>
    %109 = arith.addf %106, %108 : vector<32x4xf32>
    %cst_69 = arith.constant dense<0xFF800000> : vector<4xf32>
    %110 = vector.multi_reduction <maximumf>, %109, %cst_69 [0] : vector<32x4xf32> to vector<4xf32>
    %111 = vector.shape_cast %110 : vector<4xf32> to vector<1x4xf32>
    %112 = vector.broadcast %111 : vector<1x4xf32> to vector<32x4xf32>
    %113 = arith.subf %109, %112 : vector<32x4xf32>
    %114 = math.exp %113 : vector<32x4xf32>
    %cst_70 = arith.constant dense<0.000000e+00> : vector<4xf32>
    %115 = vector.multi_reduction <add>, %114, %cst_70 [0] : vector<32x4xf32> to vector<4xf32>
    %116 = vector.shape_cast %115 : vector<4xf32> to vector<1x4xf32>
    %117 = tpu.reciprocal %116 {approx = true} : vector<1x4xf32> -> vector<1x4xf32>
    %118 = vector.broadcast %117 : vector<1x4xf32> to vector<32x4xf32>
    %119 = arith.mulf %114, %118 : vector<32x4xf32>
    %120 = arith.truncf %119 : vector<32x4xf32> to vector<32x4xbf16>
    %121 = arith.truncf %103 : vector<32x16xf32> to vector<32x16xbf16>
    %cst_71 = arith.constant dense<0.000000e+00> : vector<4x16xf32>
    %122 = tpu.matmul %120, %121, %cst_71 {dimension_numbers = #tpu.dot_dimension_numbers<[0], [0], [1], [1], [0, 1, 1, 1], [], []>} : vector<32x4xbf16>, vector<32x16xbf16>, vector<4x16xf32> -> vector<4x16xf32>
    %c0_72 = arith.constant 0 : index
    %c0_73 = arith.constant 0 : index
    %c0_74 = arith.constant 0 : index
    %123 = vector.load %arg10[%c0_72, %c0_73, %c0_74] : memref<1x4x16xf32, #tpu.memory_space<vmem>>, vector<1x4x16xf32>
    %124 = vector.shape_cast %123 : vector<1x4x16xf32> to vector<4x16xf32>
    %125 = vector.shape_cast %122 : vector<4x16xf32> to vector<1x4x16xf32>
    tpu.vector_store %arg10[%c0_72, %c0_73, %c0_74], %125 {strides = array<i32>} : memref<1x4x16xf32, #tpu.memory_space<vmem>>, vector<1x4x16xf32>,
    return
  }
  func.func @transform_0(%arg0: i32, %arg1: memref<4xf32, #tpu.memory_space<smem>>, %arg2: memref<4xf32, #tpu.memory_space<smem>>) -> (i32, i32, i32, i32) {
    %c0_i32 = arith.constant 0 : i32
    %c0_i32_0 = arith.constant 0 : i32
    %c0_i32_1 = arith.constant 0 : i32
    %c0_i32_2 = arith.constant 0 : i32
    return %arg0, %c0_i32, %c0_i32_0, %c0_i32_1 : i32, i32, i32, i32
  }
  func.func @transform_1(%arg0: i32, %arg1: memref<4xf32, #tpu.memory_space<smem>>, %arg2: memref<4xf32, #tpu.memory_space<smem>>) -> (i32, i32) {
    %c0_i32 = arith.constant 0 : i32
    %c0_i32_0 = arith.constant 0 : i32
    %c0_i32_1 = arith.constant 0 : i32
    return %c0_i32, %c0_i32_0 : i32, i32
  }
  func.func @transform_2(%arg0: i32, %arg1: memref<4xf32, #tpu.memory_space<smem>>, %arg2: memref<4xf32, #tpu.memory_space<smem>>) -> (i32, i32) {
    %c0_i32 = arith.constant 0 : i32
    %c0_i32_0 = arith.constant 0 : i32
    %c0_i32_1 = arith.constant 0 : i32
    return %c0_i32, %c0_i32_0 : i32, i32
  }
  func.func @transform_3(%arg0: i32, %arg1: memref<4xf32, #tpu.memory_space<smem>>, %arg2: memref<4xf32, #tpu.memory_space<smem>>) -> (i32, i32) {
    %c0_i32 = arith.constant 0 : i32
    %c0_i32_0 = arith.constant 0 : i32
    %c0_i32_1 = arith.constant 0 : i32
    return %c0_i32, %c0_i32_0 : i32, i32
  }
  func.func @transform_4(%arg0: i32, %arg1: memref<4xf32, #tpu.memory_space<smem>>, %arg2: memref<4xf32, #tpu.memory_space<smem>>) -> (i32, i32) {
    %c0_i32 = arith.constant 0 : i32
    %c0_i32_0 = arith.constant 0 : i32
    %c0_i32_1 = arith.constant 0 : i32
    return %c0_i32, %c0_i32_0 : i32, i32
  }
  func.func @transform_5(%arg0: i32, %arg1: memref<4xf32, #tpu.memory_space<smem>>, %arg2: memref<4xf32, #tpu.memory_space<smem>>) -> (i32, i32) {
    %c0_i32 = arith.constant 0 : i32
    %c0_i32_0 = arith.constant 0 : i32
    %c0_i32_1 = arith.constant 0 : i32
    return %c0_i32, %c0_i32_0 : i32, i32
  }
  func.func @transform_6(%arg0: i32, %arg1: memref<4xf32, #tpu.memory_space<smem>>, %arg2: memref<4xf32, #tpu.memory_space<smem>>) -> (i32, i32) {
    %c0_i32 = arith.constant 0 : i32
    %c0_i32_0 = arith.constant 0 : i32
    %c0_i32_1 = arith.constant 0 : i32
    return %c0_i32, %c0_i32_0 : i32, i32
  }
  func.func @transform_7(%arg0: i32, %arg1: memref<4xf32, #tpu.memory_space<smem>>, %arg2: memref<4xf32, #tpu.memory_space<smem>>) -> (i32, i32, i32) {
    %c0_i32 = arith.constant 0 : i32
    %c0_i32_0 = arith.constant 0 : i32
    %c0_i32_1 = arith.constant 0 : i32
    return %arg0, %c0_i32, %c0_i32_0 : i32, i32, i32
  }
}

</mosaic_0001>

<llo_original>
// kernel: tpu_custom_call.1
$region0: #{tpu_custom_call.1}
  #allocation0 [shape = 'u32[]', space=smem, size = 0x4, offset = 0x4, fixed_abs, tag = 'smem constant byte address 0x4 - core index']
  #allocation1 [shape = 'u32[144,128]{1,0:T(1,128)}', space=vmem, size = 0x12000, scoped, tag = 'internal scratch']
  #allocation2 [shape = 'bf16[32,32]{1,0:T(8,128)(2,1)}', space=vmem, size = 0x2000, scoped, tag = 'scratch operand']
  #allocation3 [shape = 'bf16[32,32]{1,0:T(8,128)(2,1)}', space=vmem, size = 0x2000, scoped, tag = 'scratch operand']
  #allocation4 [shape = 's32[1]{0}', space=sflag, size = 0x4, scoped, tag = 'scoped memory for tpu_custom_call.1']
  #allocation5 [shape = 'u8[512]{0}', space=smem, size = 0x200, scoped, tag = 'prefetched SMEM operand 0']
  #allocation6 [shape = 'u8[512]{0}', space=smem, size = 0x200, scoped, tag = 'prefetched SMEM operand 1']
  %s0 = inlined_call_operand.vmem [shape: f32[4], index: 0, kind: input, shape index: {}]
  %s1 = inlined_call_operand.vmem [shape: f32[4], index: 1, kind: input, shape index: {}]
  %s2 = inlined_call_operand.hbm [shape: bf16[2,4,32,32], index: 2, kind: input, shape index: {}]
  %s3 = inlined_call_operand.vmem [shape: bf16[32,16], index: 3, kind: input, shape index: {}]
  %s4 = inlined_call_operand.vmem [shape: f32[1,16], index: 4, kind: input, shape index: {}]
  %s5 = inlined_call_operand.vmem [shape: bf16[32,16], index: 5, kind: input, shape index: {}]
  %s6 = inlined_call_operand.vmem [shape: f32[1,16], index: 6, kind: input, shape index: {}]
  %s7 = inlined_call_operand.vmem [shape: bf16[16,4], index: 7, kind: input, shape index: {}]
  %s8 = inlined_call_operand.vmem [shape: f32[1,4], index: 8, kind: input, shape index: {}]
  %s9 = inlined_call_operand.hbm [shape: f32[2,4,16], index: 9, kind: output, shape index: {}]
  %s10 = sld [smem:[#allocation0]]
  $region65: #{tpu_custom_call.1} parent=0
    _
  %s12 = ssub.s32 1, %s10
  %s13 = scalar_select 0, %s12, %s10
  %s14 = sshll.u32 %s0, 4
  %s15 = int_to_ptr.vmem [resolvable:$true] %s14
  %17 = dma.vmem_to_smem %s15, 16, [#allocation5], [#allocation4]
  %s18 = sshll.u32 %s1, 4
  %s19 = int_to_ptr.vmem [resolvable:$true] %s18
  %21 = dma.vmem_to_smem %s19, 16, [#allocation6], [#allocation4]
  %22 = dma.done [#allocation4], 32
  %23 = sfence
  $region1: #{tpu_custom_call.1} parent=0
    #allocation7 [shape = 'u8[65536]{0}', space=vmem, size = 0x10000, scoped, tag = 'input window, operand 2']
    #allocation8 [shape = 's32[2]{0}', space=sflag, size = 0x8, scoped, tag = 'scoped memory for tpu_custom_call.1']
    #allocation9 [shape = 's32[2]{0}', space=sflag, size = 0x8, scoped, tag = 'scoped memory for tpu_custom_call.1']
    #allocation10 [shape = 'u8[4096]{0}', space=vmem, size = 0x1000, scoped, tag = 'output window, operand 0']
    %24 = vsyncpa [#allocation8], 0
    %s25 = scalar_lea.sflag [#allocation8], 1
    %26 = vsyncpa %s25, 0
    %27 = vsyncpa [#allocation9], 0
    %s28 = scalar_lea.sflag [#allocation9], 1
    %29 = vsyncpa %s28, 0
    loop: start=0, step=1, limit=4
    $region2: #{tpu_custom_call.1} parent=1 // loop_pre_header
      _
    $region3: #{tpu_custom_call.1} parent=1 // loop_header
      %s31 = sphi 0, %s35
      %p32 = scmp.ge.s32.totalorder %s31, 4
      %s41 = sphi 0, %s43
      %s44 = sphi 0, %s41
      %s45 = sphi 0, %s44
      %s61 = sphi 0, %s45
      %s65 = sphi 0, %s65
      %s67 = sphi 0, %s65
      %s68 = sphi 0, %s67
      %s82 = sphi 0, %s68
      %s86 = sphi 0, %s86
      %s88 = sphi 0, %s86
      %s89 = sphi 0, %s88
      %s103 = sphi 0, %s89
      %s107 = sphi 0, %s107
      %s109 = sphi 0, %s107
      %s110 = sphi 0, %s109
      %s124 = sphi 0, %s110
      %s128 = sphi 0, %s128
      %s130 = sphi 0, %s128
      %s131 = sphi 0, %s130
      %s145 = sphi 0, %s131
      %s149 = sphi 0, %s149
      %s151 = sphi 0, %s149
      %s152 = sphi 0, %s151
      %s166 = sphi 0, %s152
      %s170 = sphi 0, %s170
      %s172 = sphi 0, %s170
      %s173 = sphi 0, %s172
      %s187 = sphi 0, %s173
      %s193 = sphi 0, %s195
      %s196 = sphi 0, %s193
      %s197 = sphi 0, %s196
      %s213 = sphi 0, %s197
    $region4: #{tpu_custom_call.1} parent=1 // loop_header_branch
      %34 = sbr.rel (%p32) target = $region8
    $region5: #{tpu_custom_call.1} parent=1 // loop_body
      %s36 = ssub.s32 %s31, 1
      %s37 = ssub.s32 %s31, 2
      %s38 = sadd.s32 %s31, 1
      %s39 = ssub.s32 %s31, %s38
      %p40 = scmp.eq.s32.totalorder %s39, 0
      %s42 = sadd.s32 %s41, 1
      %s43 = scalar_select %p40, %s41, %s42
      %p46 = pneg %p40
      %p47 = scmp.eq.s32.totalorder %s31, 1
      %p48 = por %p46, %p47
      %p49 = scmp.ne.s32.totalorder %s41, %s44
      %p50 = scmp.eq.s32.totalorder %s31, 0
      %p51 = por %p49, %p50
      %p52 = scmp.ne.s32.totalorder %s41, %s44
      %p53 = scmp.eq.s32.totalorder %s36, 1
      %p54 = por %p52, %p53
      %p55 = scmp.ne.s32.totalorder %s44, %s45
      %p56 = scmp.eq.s32.totalorder %s36, 0
      %p57 = por %p55, %p56
      %p58 = scmp.ne.s32.totalorder %s44, %s45
      %p59 = scmp.eq.s32.totalorder %s37, 1
      %p60 = por %p58, %p59
      %p62 = scmp.ne.s32.totalorder %s45, %s61
      %p63 = scmp.eq.s32.totalorder %s37, 0
      %p64 = por %p62, %p63
      %s66 = sadd.s32 %s65, 1
      %p69 = scmp.eq.s32.totalorder %s31, 1
      %p70 = scmp.ne.s32.totalorder %s65, %s67
      %p71 = scmp.eq.s32.totalorder %s31, 0
      %p72 = por %p70, %p71
      %p73 = scmp.ne.s32.totalorder %s65, %s67
      %p74 = scmp.eq.s32.totalorder %s36, 1
      %p75 = por %p73, %p74
      %p76 = scmp.ne.s32.totalorder %s67, %s68
      %p77 = scmp.eq.s32.totalorder %s36, 0
      %p78 = por %p76, %p77
      %p79 = scmp.ne.s32.totalorder %s67, %s68
      %p80 = scmp.eq.s32.totalorder %s37, 1
      %p81 = por %p79, %p80
      %p83 = scmp.ne.s32.totalorder %s68, %s82
      %p84 = scmp.eq.s32.totalorder %s37, 0
      %p85 = por %p83, %p84
      %s87 = sadd.s32 %s86, 1
      %p90 = scmp.eq.s32.totalorder %s31, 1
      %p91 = scmp.ne.s32.totalorder %s86, %s88
      %p92 = scmp.eq.s32.totalorder %s31, 0
      %p93 = por %p91, %p92
      %p94 = scmp.ne.s32.totalorder %s86, %s88
      %p95 = scmp.eq.s32.totalorder %s36, 1
      %p96 = por %p94, %p95
      %p97 = scmp.ne.s32.totalorder %s88, %s89
      %p98 = scmp.eq.s32.totalorder %s36, 0
      %p99 = por %p97, %p98
      %p100 = scmp.ne.s32.totalorder %s88, %s89
      %p101 = scmp.eq.s32.totalorder %s37, 1
      %p102 = por %p100, %p101
      %p104 = scmp.ne.s32.totalorder %s89, %s103
      %p105 = scmp.eq.s32.totalorder %s37, 0
      %p106 = por %p104, %p105
      %s108 = sadd.s32 %s107, 1
      %p111 = scmp.eq.s32.totalorder %s31, 1
      %p112 = scmp.ne.s32.totalorder %s107, %s109
      %p113 = scmp.eq.s32.totalorder %s31, 0
      %p114 = por %p112, %p113
      %p115 = scmp.ne.s32.totalorder %s107, %s109
      %p116 = scmp.eq.s32.totalorder %s36, 1
      %p117 = por %p115, %p116
      %p118 = scmp.ne.s32.totalorder %s109, %s110
      %p119 = scmp.eq.s32.totalorder %s36, 0
      %p120 = por %p118, %p119
      %p121 = scmp.ne.s32.totalorder %s109, %s110
      %p122 = scmp.eq.s32.totalorder %s37, 1
      %p123 = por %p121, %p122
      %p125 = scmp.ne.s32.totalorder %s110, %s124
      %p126 = scmp.eq.s32.totalorder %s37, 0
      %p127 = por %p125, %p126
      %s129 = sadd.s32 %s128, 1
      %p132 = scmp.eq.s32.totalorder %s31, 1
      %p133 = scmp.ne.s32.totalorder %s128, %s130
      %p134 = scmp.eq.s32.totalorder %s31, 0
      %p135 = por %p133, %p134
      %p136 = scmp.ne.s32.totalorder %s128, %s130
      %p137 = scmp.eq.s32.totalorder %s36, 1
      %p138 = por %p136, %p137
      %p139 = scmp.ne.s32.totalorder %s130, %s131
      %p140 = scmp.eq.s32.totalorder %s36, 0
      %p141 = por %p139, %p140
      %p142 = scmp.ne.s32.totalorder %s130, %s131
      %p143 = scmp.eq.s32.totalorder %s37, 1
      %p144 = por %p142, %p143
      %p146 = scmp.ne.s32.totalorder %s131, %s145
      %p147 = scmp.eq.s32.totalorder %s37, 0
      %p148 = por %p146, %p147
      %s150 = sadd.s32 %s149, 1
      %p153 = scmp.eq.s32.totalorder %s31, 1
      %p154 = scmp.ne.s32.totalorder %s149, %s151
      %p155 = scmp.eq.s32.totalorder %s31, 0
      %p156 = por %p154, %p155
      %p157 = scmp.ne.s32.totalorder %s149, %s151
      %p158 = scmp.eq.s32.totalorder %s36, 1
      %p159 = por %p157, %p158
      %p160 = scmp.ne.s32.totalorder %s151, %s152
      %p161 = scmp.eq.s32.totalorder %s36, 0
      %p162 = por %p160, %p161
      %p163 = scmp.ne.s32.totalorder %s151, %s152
      %p164 = scmp.eq.s32.totalorder %s37, 1
      %p165 = por %p163, %p164
      %p167 = scmp.ne.s32.totalorder %s152, %s166
      %p168 = scmp.eq.s32.totalorder %s37, 0
      %p169 = por %p167, %p168
      %s171 = sadd.s32 %s170, 1
      %p174 = scmp.eq.s32.totalorder %s31, 1
      %p175 = scmp.ne.s32.totalorder %s170, %s172
      %p176 = scmp.eq.s32.totalorder %s31, 0
      %p177 = por %p175, %p176
      %p178 = scmp.ne.s32.totalorder %s170, %s172
      %p179 = scmp.eq.s32.totalorder %s36, 1
      %p180 = por %p178, %p179
      %p181 = scmp.ne.s32.totalorder %s172, %s173
      %p182 = scmp.eq.s32.totalorder %s36, 0
      %p183 = por %p181, %p182
      %p184 = scmp.ne.s32.totalorder %s172, %s173
      %p185 = scmp.eq.s32.totalorder %s37, 1
      %p186 = por %p184, %p185
      %p188 = scmp.ne.s32.totalorder %s173, %s187
      %p189 = scmp.eq.s32.totalorder %s37, 0
      %p190 = por %p188, %p189
      %s191 = ssub.s32 %s31, %s38
      %p192 = scmp.eq.s32.totalorder %s191, 0
      %s194 = sadd.s32 %s193, 1
      %s195 = scalar_select %p192, %s193, %s194
      %p198 = pneg %p192
      %p199 = scmp.eq.s32.totalorder %s31, 1
      %p200 = por %p198, %p199
      %p201 = scmp.ne.s32.totalorder %s193, %s196
      %p202 = scmp.eq.s32.totalorder %s31, 0
      %p203 = por %p201, %p202
      %p204 = scmp.ne.s32.totalorder %s193, %s196
      %p205 = scmp.eq.s32.totalorder %s36, 1
      %p206 = por %p204, %p205
      %p207 = scmp.ne.s32.totalorder %s196, %s197
      %p208 = scmp.eq.s32.totalorder %s36, 0
      %p209 = por %p207, %p208
      %p210 = scmp.ne.s32.totalorder %s196, %s197
      %p211 = scmp.eq.s32.totalorder %s37, 1
      %p212 = por %p210, %p211
      %p214 = scmp.ne.s32.totalorder %s197, %s213
      %p215 = scmp.eq.s32.totalorder %s37, 0
      %p216 = por %p214, %p215
      %p217 = scmp.le.s32.totalorder 1, %s31
      %p218 = scmp.lt.s32.totalorder %s31, 3
      %p219 = pnand %p217, %p218
      %p220 = pneg %p219
      // Predicated region
      $region9: #{tpu_custom_call.1} parent=5 // pred_check
        _
      $region10: #{tpu_custom_call.1} parent=5 // pred_check_branch
        %222 = sbr.rel (%p219) target = $region12
      $region11: #{tpu_custom_call.1} parent=5 // pred_region
        %s223 = ssub.s32 %s31, 1
        // Predicated region
        $region13: #{tpu_custom_call.1} parent=11 // pred_check
          %p224 = pneg %p78
        $region14: #{tpu_custom_call.1} parent=11 // pred_check_branch
          %226 = sbr.rel (%p224) target = $region16
        $region15: #{tpu_custom_call.1} parent=11 // pred_region
          _
        $region16: #{tpu_custom_call.1} parent=11 // pred_fallthru
          _
        // Predicated region
        $region17: #{tpu_custom_call.1} parent=11 // pred_check
          %p227 = pneg %p99
        $region18: #{tpu_custom_call.1} parent=11 // pred_check_branch
          %229 = sbr.rel (%p227) target = $region20
        $region19: #{tpu_custom_call.1} parent=11 // pred_region
          _
        $region20: #{tpu_custom_call.1} parent=11 // pred_fallthru
          _
        // Predicated region
        $region21: #{tpu_custom_call.1} parent=11 // pred_check
          %p230 = pneg %p120
        $region22: #{tpu_custom_call.1} parent=11 // pred_check_branch
          %232 = sbr.rel (%p230) target = $region24
        $region23: #{tpu_custom_call.1} parent=11 // pred_region
          _
        $region24: #{tpu_custom_call.1} parent=11 // pred_fallthru
          _
        // Predicated region
        $region25: #{tpu_custom_call.1} parent=11 // pred_check
          %p233 = pneg %p141
        $region26: #{tpu_custom_call.1} parent=11 // pred_check_branch
          %235 = sbr.rel (%p233) target = $region28
        $region27: #{tpu_custom_call.1} parent=11 // pred_region
          _
        $region28: #{tpu_custom_call.1} parent=11 // pred_fallthru
          _
        // Predicated region
        $region29: #{tpu_custom_call.1} parent=11 // pred_check
          %p236 = pneg %p162
        $region30: #{tpu_custom_call.1} parent=11 // pred_check_branch
          %238 = sbr.rel (%p236) target = $region32
        $region31: #{tpu_custom_call.1} parent=11 // pred_region
          _
        $region32: #{tpu_custom_call.1} parent=11 // pred_fallthru
          _
        // Predicated region
        $region33: #{tpu_custom_call.1} parent=11 // pred_check
          %p239 = pneg %p183
        $region34: #{tpu_custom_call.1} parent=11 // pred_check_branch
          %241 = sbr.rel (%p239) target = $region36
        $region35: #{tpu_custom_call.1} parent=11 // pred_region
          _
        $region36: #{tpu_custom_call.1} parent=11 // pred_fallthru
          _
      $region12: #{tpu_custom_call.1} parent=5 // pred_fallthru
        _
      %p242 = scmp.lt.s32.totalorder %s31, 2
      // Predicated region
      $region37: #{tpu_custom_call.1} parent=5 // pred_check
        %p243 = pneg %p242
      $region38: #{tpu_custom_call.1} parent=5 // pred_check_branch
        %245 = sbr.rel (%p243) target = $region40
      $region39: #{tpu_custom_call.1} parent=5 // pred_region
        // Predicated region
        $region41: #{tpu_custom_call.1} parent=39 // pred_check
          %p246 = pneg %p51
        $region42: #{tpu_custom_call.1} parent=39 // pred_check_branch
          %248 = sbr.rel (%p246) target = $region44
        $region43: #{tpu_custom_call.1} parent=39 // pred_region
          %s249 = sand.u32 %s41, 1
          %s250 = scalar_lea.sflag [#allocation8], %s249
          %s251 = sand.u32 %s41, 1
          %s252 = smul.addr %s251, 64
          %s253 = scalar_lea.vmem [#allocation7], %s252
          %s255 = ssub.s32 1024, 1024
          %256 = vsyncadd %s250, %s255
          %s257 = smul.addr %s31, 16
          %s258 = smul.addr %s257, 64
          %s259 = scalar_lea.hbm %s2, %s258
          %s260 = sshll.u32 %s253, 4
          %s261 = int_to_ptr.vmem [resolvable:$true] %s260
          %266 = dma.hbm_to_vmem [thread:$0]  %s259, 1024, %s261, %s250, 64, 64, 4
        $region44: #{tpu_custom_call.1} parent=39 // pred_fallthru
          _
      $region40: #{tpu_custom_call.1} parent=5 // pred_fallthru
        _
      %p267 = scmp.le.s32.totalorder 1, %s31
      %p268 = scmp.lt.s32.totalorder %s31, 3
      %p269 = pnand %p267, %p268
      %p270 = pneg %p269
      // Predicated region
      $region45: #{tpu_custom_call.1} parent=5 // pred_check
        _
      $region46: #{tpu_custom_call.1} parent=5 // pred_check_branch
        %272 = sbr.rel (%p269) target = $region48
      $region47: #{tpu_custom_call.1} parent=5 // pred_region
        %s273 = ssub.s32 %s31, 1
        %s274 = sand.u32 %s44, 1
        %s275 = scalar_lea.sflag [#allocation8], %s274
        %s276 = sand.u32 %s44, 1
        %s277 = smul.addr %s276, 64
        %s278 = scalar_lea.vmem [#allocation7], %s277
        // Predicated region
        $region49: #{tpu_custom_call.1} parent=47 // pred_check
          %p279 = pneg %p57
        $region50: #{tpu_custom_call.1} parent=47 // pred_check_branch
          %281 = sbr.rel (%p279) target = $region52
        $region51: #{tpu_custom_call.1} parent=47 // pred_region
          %282 = dma.done %s275, 1024
        $region52: #{tpu_custom_call.1} parent=47 // pred_fallthru
          _
        %s283 = sand.u32 %s44, 1
        %s284 = scalar_lea.sflag [#allocation8], %s283
        %s285 = sand.u32 %s44, 1
        %s286 = smul.addr %s285, 64
        %s287 = scalar_lea.vmem [#allocation7], %s286
        %p288 = pneg %p57
        %p289 = pneg %p54
        %p290 = pneg %p78
        %p291 = pneg %p75
        %p292 = pneg %p99
        %p293 = pneg %p96
        %p294 = pneg %p120
        %p295 = pneg %p117
        %p296 = pneg %p141
        %p297 = pneg %p138
        %p298 = pneg %p162
        %p299 = pneg %p159
        %p300 = pneg %p183
        %p301 = pneg %p180
        %p302 = pneg %p209
        %p303 = pneg %p206
        %s304 = sand.u32 %s196, 1
        %s305 = scalar_lea.sflag [#allocation9], %s304
        %s306 = sand.u32 %s196, 1
        %s307 = smul.addr %s306, 4
        %s308 = scalar_lea.vmem [#allocation10], %s307
        %v310 = vld [vmem:[%s278] sm:$0xf]
        %v311 = vld [vmem:[%s278 + $0x4] sm:$0xf]
        %v312 = vunpack.c.l.bf16 %v310
        %v313 = vunpack.c.l.bf16 %v311
        %s314 = sld [smem:[#allocation5]]
        %v315 = vstv %s314
        %v316 = vmul.f32 %v312, %v315
        %v317 = vmul.f32 %v313, %v315
        %s318 = sld [smem:[#allocation6]]
        %v319 = vstv %s318
        %v320 = vmul.f32 %v312, %v319
        %v321 = vmul.f32 %v313, %v319
        %s322 = scalar_lea.vmem %s278, 16 [#allocation7]
        %v323 = vld [vmem:[%s322] sm:$0xf]
        %v324 = vld [vmem:[%s322 + $0x4] sm:$0xf]
        %v325 = vunpack.c.l.bf16 %v323
        %v326 = vunpack.c.l.bf16 %v324
        %s327 = sld [smem:[#allocation5 + $0x1]]
        %v328 = vstv %s327
        %v329 = vmul.f32 %v325, %v328
        %v330 = vmul.f32 %v326, %v328
        %v331 = vadd.f32 %v316, %v329
        %v332 = vadd.f32 %v317, %v330
        %s333 = sld [smem:[#allocation6 + $0x1]]
        %v334 = vstv %s333
        %v335 = vmul.f32 %v325, %v334
        %v336 = vmul.f32 %v326, %v334
        %v337 = vadd.f32 %v320, %v335
        %v338 = vadd.f32 %v321, %v336
        %s339 = scalar_lea.vmem %s278, 32 [#allocation7]
        %v340 = vld [vmem:[%s339] sm:$0xf]
        %v341 = vld [vmem:[%s339 + $0x4] sm:$0xf]
        %v342 = vunpack.c.l.bf16 %v340
        %v343 = vunpack.c.l.bf16 %v341
        %s344 = sld [smem:[#allocation5 + $0x2]]
        %v345 = vstv %s344
        %v346 = vmul.f32 %v342, %v345
        %v347 = vmul.f32 %v343, %v345
        %v348 = vadd.f32 %v331, %v346
        %v349 = vadd.f32 %v332, %v347
        %s350 = sld [smem:[#allocation6 + $0x2]]
        %v351 = vstv %s350
        %v352 = vmul.f32 %v342, %v351
        %v353 = vmul.f32 %v343, %v351
        %v354 = vadd.f32 %v337, %v352
        %v355 = vadd.f32 %v338, %v353
        %s356 = scalar_lea.vmem %s278, 48 [#allocation7]
        %v357 = vld [vmem:[%s356] sm:$0xf]
        %v358 = vld [vmem:[%s356 + $0x4] sm:$0xf]
        %v359 = vunpack.c.l.bf16 %v357
        %v360 = vunpack.c.l.bf16 %v358
        %s361 = sld [smem:[#allocation5 + $0x3]]
        %v362 = vstv %s361
        %v363 = vmul.f32 %v359, %v362
        %v364 = vmul.f32 %v360, %v362
        %v365 = vadd.f32 %v348, %v363
        %v366 = vadd.f32 %v349, %v364
        %s367 = sld [smem:[#allocation6 + $0x3]]
        %v368 = vstv %s367
        %v369 = vmul.f32 %v359, %v368
        %v370 = vmul.f32 %v360, %v368
        %v371 = vadd.f32 %v354, %v369
        %v372 = vadd.f32 %v355, %v370
        %v373 = vpack.c.bf16 %v366, %v365
        %v375 = vunpack.c.l.b16 %v373
        %v376 = vunpack.c.h.b16 %v373
        %v377 = vpack.c.b16 %v375, %v375
        %v378 = vpack.c.b16 %v376, %v376
        %vm381 = vcmask 257024
        %382 = vst.msk [vmem:[#allocation2] sm:$0xf] %vm381, %v377
        %383 = vst.msk [vmem:[#allocation2 + $0x4] sm:$0xf] %vm381, %v378
        %v384 = vpack.c.bf16 %v372, %v371
        %v386 = vunpack.c.l.b16 %v384
        %v387 = vunpack.c.h.b16 %v384
        %v388 = vpack.c.b16 %v386, %v386
        %v389 = vpack.c.b16 %v387, %v387
        %392 = vst.msk [vmem:[#allocation3] sm:$0xf] %vm381, %v388
        %393 = vst.msk [vmem:[#allocation3 + $0x4] sm:$0xf] %vm381, %v389
        %v394 = vld [vmem:[%s278 + $0x8] sm:$0xf]
        %v395 = vld [vmem:[%s278 + $0xc] sm:$0xf]
        %v396 = vunpack.c.l.bf16 %v394
        %v397 = vunpack.c.l.bf16 %v395
        %s398 = sld [smem:[#allocation5]]
        %v399 = vstv %s398
        %v400 = vmul.f32 %v396, %v399
        %v401 = vmul.f32 %v397, %v399
        %s402 = sld [smem:[#allocation6]]
        %v403 = vstv %s402
        %v404 = vmul.f32 %v396, %v403
        %v405 = vmul.f32 %v397, %v403
        %v406 = vld [vmem:[%s322 + $0x8] sm:$0xf]
        %v407 = vld [vmem:[%s322 + $0xc] sm:$0xf]
        %v408 = vunpack.c.l.bf16 %v406
        %v409 = vunpack.c.l.bf16 %v407
        %s410 = sld [smem:[#allocation5 + $0x1]]
        %v411 = vstv %s410
        %v412 = vmul.f32 %v408, %v411
        %v413 = vmul.f32 %v409, %v411
        %v414 = vadd.f32 %v400, %v412
        %v415 = vadd.f32 %v401, %v413
        %s416 = sld [smem:[#allocation6 + $0x1]]
        %v417 = vstv %s416
        %v418 = vmul.f32 %v408, %v417
        %v419 = vmul.f32 %v409, %v417
        %v420 = vadd.f32 %v404, %v418
        %v421 = vadd.f32 %v405, %v419
        %v422 = vld [vmem:[%s339 + $0x8] sm:$0xf]
        %v423 = vld [vmem:[%s339 + $0xc] sm:$0xf]
        %v424 = vunpack.c.l.bf16 %v422
        %v425 = vunpack.c.l.bf16 %v423
        %s426 = sld [smem:[#allocation5 + $0x2]]
        %v427 = vstv %s426
        %v428 = vmul.f32 %v424, %v427
        %v429 = vmul.f32 %v425, %v427
        %v430 = vadd.f32 %v414, %v428
        %v431 = vadd.f32 %v415, %v429
        %s432 = sld [smem:[#allocation6 + $0x2]]
        %v433 = vstv %s432
        %v434 = vmul.f32 %v424, %v433
        %v435 = vmul.f32 %v425, %v433
        %v436 = vadd.f32 %v420, %v434
        %v437 = vadd.f32 %v421, %v435
        %v438 = vld [vmem:[%s356 + $0x8] sm:$0xf]
        %v439 = vld [vmem:[%s356 + $0xc] sm:$0xf]
        %v440 = vunpack.c.l.bf16 %v438
        %v441 = vunpack.c.l.bf16 %v439
        %s442 = sld [smem:[#allocation5 + $0x3]]
        %v443 = vstv %s442
        %v444 = vmul.f32 %v440, %v443
        %v445 = vmul.f32 %v441, %v443
        %v446 = vadd.f32 %v430, %v444
        %v447 = vadd.f32 %v431, %v445
        %s448 = sld [smem:[#allocation6 + $0x3]]
        %v449 = vstv %s448
        %v450 = vmul.f32 %v440, %v449
        %v451 = vmul.f32 %v441, %v449
        %v452 = vadd.f32 %v436, %v450
        %v453 = vadd.f32 %v437, %v451
        %v454 = vpack.c.bf16 %v447, %v446
        %v456 = vunpack.c.l.b16 %v454
        %v457 = vunpack.c.h.b16 %v454
        %v458 = vpack.c.b16 %v456, %v456
        %v459 = vpack.c.b16 %v457, %v457
        %462 = vst.msk [vmem:[#allocation2 + $0x8] sm:$0xf] %vm381, %v458
        %463 = vst.msk [vmem:[#allocation2 + $0xc] sm:$0xf] %vm381, %v459
        %v464 = vpack.c.bf16 %v453, %v452
        %v466 = vunpack.c.l.b16 %v464
        %v467 = vunpack.c.h.b16 %v464
        %v468 = vpack.c.b16 %v466, %v466
        %v469 = vpack.c.b16 %v467, %v467
        %472 = vst.msk [vmem:[#allocation3 + $0x8] sm:$0xf] %vm381, %v468
        %473 = vst.msk [vmem:[#allocation3 + $0xc] sm:$0xf] %vm381, %v469
        %v474 = vld [vmem:[#allocation2] sm:$0xf]
        %v475 = vld [vmem:[#allocation2 + $0x4] sm:$0xf]
        %v476 = vld [vmem:[#allocation2 + $0x8] sm:$0xf]
        %v477 = vld [vmem:[#allocation2 + $0xc] sm:$0xf]
        %v478 = vld [vmem:[%s3] sm:$0xf]
        %v479 = vld [vmem:[%s3 + $0x4] sm:$0xf]
        %v480 = vld [vmem:[%s3 + $0x8] sm:$0xf]
        %v481 = vld [vmem:[%s3 + $0xc] sm:$0xf]
        %v482 = vld [vmem:[%s4] sm:$0x1]
        %v484 = vlaneseq
        %v485 = vshrl.u32 %v484, 7
        %v486 = vsub.s32 0, %v485
        %v487 = vrot.slane %v482, %v486
        %v493 = vunpack.c.l.b16 %v474
        %v494 = vunpack.c.l.b16 %v475
        %v495 = vunpack.c.l.b16 %v476
        %v496 = vunpack.c.l.b16 %v477
        %v497 = vpack.c.b16 %v494, %v493
        %v498 = vpack.c.b16 %v496, %v495
        %v503 = vunpack.c.l.b16 %v478
        %v504 = vunpack.c.l.b16 %v479
        %v505 = vunpack.c.l.b16 %v480
        %v506 = vunpack.c.l.b16 %v481
        %v507 = vpack.c.b16 %v504, %v503
        %v508 = vpack.c.b16 %v506, %v505
        %vm511 = vcmask 261120
        %v513 = vsel %vm511, %v497, 0
        %v516 = vsel %vm511, %v498, 0
        %518 = vmatprep.subr.bf16.mxu0 0
        %519 = vmatpush1.bf16.msra.mxu0 0
        %520 = vmatprep.subr.bf16.mxu0 0
        %521 = vmatpush1.bf16.msra.mxu0 0
        %522 = vmatprep.subr.bf16.mxu0 0
        %523 = vmatpush1.bf16.msra.mxu0 0
        %524 = vmatprep.subr.bf16.mxu0 0
        %525 = vmatpush1.bf16.msra.mxu0 0
        %526 = vmatprep.subr.bf16.mxu0 0
        %527 = vmatpush1.bf16.msra.mxu0 0
        %528 = vmatprep.subr.bf16.mxu0 0
        %529 = vmatpush1.bf16.msra.mxu0 0
        %530 = vmatprep.subr.bf16.mxu0 0
        %531 = vmatpush1.bf16.msra.mxu0 %v508
        %532 = vmatprep.subr.bf16.mxu0 0
        %533 = vmatpush1.bf16.msra.mxu0 %v507
        %534 = vmatprep.subr.bf16.mxu0 0
        %535 = vmatpush2.bf16.msra.mxu0 0
        %536 = vmatprep.subr.bf16.mxu0 0
        %537 = vmatpush2.bf16.msra.mxu0 0
        %538 = vmatprep.subr.bf16.mxu0 0
        %539 = vmatpush2.bf16.msra.mxu0 0
        %540 = vmatprep.subr.bf16.mxu0 0
        %541 = vmatpush2.bf16.msra.mxu0 0
        %542 = vmatprep.subr.bf16.mxu0 0
        %543 = vmatpush2.bf16.msra.mxu0 0
        %544 = vmatprep.subr.bf16.mxu0 0
        %545 = vmatpush2.bf16.msra.mxu0 0
        %546 = vmatprep.subr.bf16.mxu0 0
        %547 = vmatpush2.bf16.msra.mxu0 0
        %548 = vmatprep.subr.bf16.mxu0 0
        %549 = vmatpush2.bf16.msra.mxu0 0
        %550 = vmatprep.mubr.bf16.mxu0 0
        %551 = vmatmul.mubr.bf16.gmra.mxu0 %v513
        %v552 = vpop.f32.mrf.mxu0
        %v553 = vadd.f32 %v487, %v552
        %v554 = vpop.f32.mrf.mxu0
        %v555 = vpop.f32.mrf.mxu0
        %v556 = vadd.f32 %v487, %v555
        %v557 = vpop.f32.mrf.mxu0
        %558 = vmatprep.mubr.bf16.mxu0 0
        %559 = vmatmul.mubr.bf16.gmra.mxu0 %v516
        %v560 = vpop.f32.mrf.mxu0
        %v561 = vadd.f32 %v487, %v560
        %v562 = vpop.f32.mrf.mxu0
        %v563 = vpop.f32.mrf.mxu0
        %v564 = vadd.f32 %v487, %v563
        %v565 = vpop.f32.mrf.mxu0
        %566 = vdwg.mxu0
        %v567 = vld [vmem:[#allocation3] sm:$0xf]
        %v568 = vld [vmem:[#allocation3 + $0x4] sm:$0xf]
        %v569 = vld [vmem:[#allocation3 + $0x8] sm:$0xf]
        %v570 = vld [vmem:[#allocation3 + $0xc] sm:$0xf]
        %v571 = vld [vmem:[%s5] sm:$0xf]
        %v572 = vld [vmem:[%s5 + $0x4] sm:$0xf]
        %v573 = vld [vmem:[%s5 + $0x8] sm:$0xf]
        %v574 = vld [vmem:[%s5 + $0xc] sm:$0xf]
        %v575 = vld [vmem:[%s6] sm:$0x1]
        %v577 = vlaneseq
        %v578 = vshrl.u32 %v577, 7
        %v579 = vsub.s32 0, %v578
        %v580 = vrot.slane %v575, %v579
        %v586 = vunpack.c.l.b16 %v567
        %v587 = vunpack.c.l.b16 %v568
        %v588 = vunpack.c.l.b16 %v569
        %v589 = vunpack.c.l.b16 %v570
        %v590 = vpack.c.b16 %v587, %v586
        %v591 = vpack.c.b16 %v589, %v588
        %v596 = vunpack.c.l.b16 %v571
        %v597 = vunpack.c.l.b16 %v572
        %v598 = vunpack.c.l.b16 %v573
        %v599 = vunpack.c.l.b16 %v574
        %v600 = vpack.c.b16 %v597, %v596
        %v601 = vpack.c.b16 %v599, %v598
        %v605 = vsel %vm511, %v590, 0
        %v608 = vsel %vm511, %v591, 0
        %610 = vmatprep.subr.bf16.mxu0 0
        %611 = vmatpush1.bf16.msra.mxu0 0
        %612 = vmatprep.subr.bf16.mxu0 0
        %613 = vmatpush1.bf16.msra.mxu0 0
        %614 = vmatprep.subr.bf16.mxu0 0
        %615 = vmatpush1.bf16.msra.mxu0 0
        %616 = vmatprep.subr.bf16.mxu0 0
        %617 = vmatpush1.bf16.msra.mxu0 0
        %618 = vmatprep.subr.bf16.mxu0 0
        %619 = vmatpush1.bf16.msra.mxu0 0
        %620 = vmatprep.subr.bf16.mxu0 0
        %621 = vmatpush1.bf16.msra.mxu0 0
        %622 = vmatprep.subr.bf16.mxu0 0
        %623 = vmatpush1.bf16.msra.mxu0 %v601
        %624 = vmatprep.subr.bf16.mxu0 0
        %625 = vmatpush1.bf16.msra.mxu0 %v600
        %626 = vmatprep.subr.bf16.mxu0 0
        %627 = vmatpush2.bf16.msra.mxu0 0
        %628 = vmatprep.subr.bf16.mxu0 0
        %629 = vmatpush2.bf16.msra.mxu0 0
        %630 = vmatprep.subr.bf16.mxu0 0
        %631 = vmatpush2.bf16.msra.mxu0 0
        %632 = vmatprep.subr.bf16.mxu0 0
        %633 = vmatpush2.bf16.msra.mxu0 0
        %634 = vmatprep.subr.bf16.mxu0 0
        %635 = vmatpush2.bf16.msra.mxu0 0
        %636 = vmatprep.subr.bf16.mxu0 0
        %637 = vmatpush2.bf16.msra.mxu0 0
        %638 = vmatprep.subr.bf16.mxu0 0
        %639 = vmatpush2.bf16.msra.mxu0 0
        %640 = vmatprep.subr.bf16.mxu0 0
        %641 = vmatpush2.bf16.msra.mxu0 0
        %642 = vmatprep.mubr.bf16.mxu0 0
        %643 = vmatmul.mubr.bf16.gmra.mxu0 %v605
        %v644 = vpop.f32.mrf.mxu0
        %v645 = vadd.f32 %v580, %v644
        %v646 = vpop.f32.mrf.mxu0
        %v647 = vpop.f32.mrf.mxu0
        %v648 = vadd.f32 %v580, %v647
        %v649 = vpop.f32.mrf.mxu0
        %650 = vmatprep.mubr.bf16.mxu0 0
        %651 = vmatmul.mubr.bf16.gmra.mxu0 %v608
        %v652 = vpop.f32.mrf.mxu0
        %v653 = vadd.f32 %v580, %v652
        %v654 = vpop.f32.mrf.mxu0
        %v655 = vpop.f32.mrf.mxu0
        %v656 = vadd.f32 %v580, %v655
        %v657 = vpop.f32.mrf.mxu0
        %658 = vdwg.mxu0
        %v659 = vpack.c.bf16 %v556, %v553
        %v660 = vpack.c.bf16 %v564, %v561
        %v661 = vld [vmem:[%s7] sm:$0xf]
        %v662 = vld [vmem:[%s7 + $0x4] sm:$0xf]
        %v663 = vld [vmem:[%s8] sm:$0x1]
        %v665 = vlaneseq
        %v666 = vshrl.u32 %v665, 7
        %v667 = vsub.s32 0, %v666
        %v668 = vrot.slane %v663, %v667
        %v672 = vunpack.c.l.b16 %v661
        %v673 = vunpack.c.l.b16 %v662
        %v674 = vpack.c.b16 %v673, %v672
        %vm676 = vcmask 130048
        %v678 = vsel %vm676, %v659, 0
        %v681 = vsel %vm676, %v660, 0
        %683 = vmatprep.subr.bf16.mxu0 0
        %684 = vmatpush1.bf16.msra.mxu0 0
        %685 = vmatprep.subr.bf16.mxu0 0
        %686 = vmatpush1.bf16.msra.mxu0 0
        %687 = vmatprep.subr.bf16.mxu0 0
        %688 = vmatpush1.bf16.msra.mxu0 0
        %689 = vmatprep.subr.bf16.mxu0 0
        %690 = vmatpush1.bf16.msra.mxu0 0
        %691 = vmatprep.subr.bf16.mxu0 0
        %692 = vmatpush1.bf16.msra.mxu0 0
        %693 = vmatprep.subr.bf16.mxu0 0
        %694 = vmatpush1.bf16.msra.mxu0 0
        %695 = vmatprep.subr.bf16.mxu0 0
        %696 = vmatpush1.bf16.msra.mxu0 0
        %697 = vmatprep.subr.bf16.mxu0 0
        %698 = vmatpush1.bf16.msra.mxu0 %v674
        %699 = vmatprep.subr.bf16.mxu0 0
        %700 = vmatpush2.bf16.msra.mxu0 0
        %701 = vmatprep.subr.bf16.mxu0 0
        %702 = vmatpush2.bf16.msra.mxu0 0
        %703 = vmatprep.subr.bf16.mxu0 0
        %704 = vmatpush2.bf16.msra.mxu0 0
        %705 = vmatprep.subr.bf16.mxu0 0
        %706 = vmatpush2.bf16.msra.mxu0 0
        %707 = vmatprep.subr.bf16.mxu0 0
        %708 = vmatpush2.bf16.msra.mxu0 0
        %709 = vmatprep.subr.bf16.mxu0 0
        %710 = vmatpush2.bf16.msra.mxu0 0
        %711 = vmatprep.subr.bf16.mxu0 0
        %712 = vmatpush2.bf16.msra.mxu0 0
        %713 = vmatprep.subr.bf16.mxu0 0
        %714 = vmatpush2.bf16.msra.mxu0 0
        %715 = vmatprep.mubr.bf16.mxu0 0
        %716 = vmatmul.mubr.bf16.gmra.mxu0 %v678
        %v717 = vpop.f32.mrf.mxu0
        %v718 = vadd.f32 %v668, %v717
        %v719 = vpop.f32.mrf.mxu0
        %v720 = vpop.f32.mrf.mxu0
        %v721 = vadd.f32 %v668, %v720
        %v722 = vpop.f32.mrf.mxu0
        %723 = vmatprep.mubr.bf16.mxu0 0
        %724 = vmatmul.mubr.bf16.gmra.mxu0 %v681
        %v725 = vpop.f32.mrf.mxu0
        %v726 = vadd.f32 %v668, %v725
        %v727 = vpop.f32.mrf.mxu0
        %v728 = vpop.f32.mrf.mxu0
        %v729 = vadd.f32 %v668, %v728
        %v730 = vpop.f32.mrf.mxu0
        %731 = vdwg.mxu0
        %vm732 = vcmask 31744
        %v733 = vsel %vm732, %v718, -inf
        %v734 = vsel %vm732, %v721, -inf
        %v735 = vsel %vm732, %v726, -inf
        %v736 = vsel %vm732, %v729, -inf
        %v737 = vmax.f32 %v733, %v734
        %v738 = vmax.f32 %v735, %v736
        %v739 = vmax.f32 %v737, %v738
        %v740 = vrot.slane %v739, 4
        %v741 = vmax.f32 %v739, %v740
        %v742 = vrot.slane %v741, 2
        %v743 = vmax.f32 %v741, %v742
        %v744 = vrot.slane %v743, 1
        %v745 = vmax.f32 %v743, %v744
        %v746 = vsub.f32 %v718, %v745
        %v747 = vsub.f32 %v721, %v745
        %v748 = vsub.f32 %v726, %v745
        %v749 = vsub.f32 %v729, %v745
        %v750 = vmul.f32 %v746, 1.442695
        %v751 = vpow.pop %v750
        %v752 = vmul.f32 %v747, 1.442695
        %v753 = vpow.pop %v752
        %v754 = vmul.f32 %v748, 1.442695
        %v755 = vpow.pop %v754
        %v756 = vmul.f32 %v749, 1.442695
        %v757 = vpow.pop %v756
        %v758 = vsel %vm732, %v751, 0.0
        %v759 = vsel %vm732, %v753, 0.0
        %v760 = vadd.f32 %v758, %v759
        %v761 = vsel %vm732, %v755, 0.0
        %v762 = vadd.f32 %v760, %v761
        %v763 = vsel %vm732, %v757, 0.0
        %v764 = vadd.f32 %v762, %v763
        %v765 = vrot.slane %v764, 4
        %v766 = vadd.f32 %v764, %v765
        %v767 = vrot.slane %v766, 2
        %v768 = vadd.f32 %v766, %v767
        %v769 = vrot.slane %v768, 1
        %v770 = vadd.f32 %v768, %v769
        %v771 = vrcp.pop %v770
        %v772 = vmul.f32 %v751, %v771
        %v773 = vmul.f32 %v753, %v771
        %v774 = vmul.f32 %v755, %v771
        %v775 = vmul.f32 %v757, %v771
        %v776 = vpack.c.bf16 %v773, %v772
        %v777 = vpack.c.bf16 %v775, %v774
        %v778 = vpack.c.bf16 %v648, %v645
        %v779 = vpack.c.bf16 %v656, %v653
        %780 = vxpose.xlu0.c.b16.start [1/8] %v776, 128
        %781 = vxpose.xlu0.c.b16.cont [2/8] %v777, 128
        %782 = vxpose.xlu0.c.b16.cont [3/8] 0, 128
        %783 = vxpose.xlu0.c.b16.cont [4/8] 0, 128
        %784 = vxpose.xlu0.c.b16.cont [5/8] 0, 128
        %785 = vxpose.xlu0.c.b16.cont [6/8] 0, 128
        %786 = vxpose.xlu0.c.b16.cont [7/8] 0, 128
        %787 = vxpose.xlu0.c.b16.end [8/8] 0, 128
        %v788 = vpop.trf.xlu0
        %v789 = vpop.trf.xlu0
        %v790 = vpop.trf.xlu0
        %v791 = vpop.trf.xlu0
        %v792 = vpop.trf.xlu0
        %v793 = vpop.trf.xlu0
        %v794 = vpop.trf.xlu0
        %v795 = vpop.trf.xlu0
        %v797 = vsel %vm511, %v788, 0
        %799 = vmatprep.subr.bf16.mxu0 0
        %800 = vmatpush1.bf16.msra.mxu0 0
        %801 = vmatprep.subr.bf16.mxu0 0
        %802 = vmatpush1.bf16.msra.mxu0 0
        %803 = vmatprep.subr.bf16.mxu0 0
        %804 = vmatpush1.bf16.msra.mxu0 0
        %805 = vmatprep.subr.bf16.mxu0 0
        %806 = vmatpush1.bf16.msra.mxu0 0
        %807 = vmatprep.subr.bf16.mxu0 0
        %808 = vmatpush1.bf16.msra.mxu0 0
        %809 = vmatprep.subr.bf16.mxu0 0
        %810 = vmatpush1.bf16.msra.mxu0 0
        %811 = vmatprep.subr.bf16.mxu0 0
        %812 = vmatpush1.bf16.msra.mxu0 %v779
        %813 = vmatprep.subr.bf16.mxu0 0
        %814 = vmatpush1.bf16.msra.mxu0 %v778
        %815 = vmatprep.subr.bf16.mxu0 0
        %816 = vmatpush2.bf16.msra.mxu0 0
        %817 = vmatprep.subr.bf16.mxu0 0
        %818 = vmatpush2.bf16.msra.mxu0 0
        %819 = vmatprep.subr.bf16.mxu0 0
        %820 = vmatpush2.bf16.msra.mxu0 0
        %821 = vmatprep.subr.bf16.mxu0 0
        %822 = vmatpush2.bf16.msra.mxu0 0
        %823 = vmatprep.subr.bf16.mxu0 0
        %824 = vmatpush2.bf16.msra.mxu0 0
        %825 = vmatprep.subr.bf16.mxu0 0
        %826 = vmatpush2.bf16.msra.mxu0 0
        %827 = vmatprep.subr.bf16.mxu0 0
        %828 = vmatpush2.bf16.msra.mxu0 0
        %829 = vmatprep.subr.bf16.mxu0 0
        %830 = vmatpush2.bf16.msra.mxu0 0
        %831 = vmatprep.mubr.bf16.mxu0 0
        %832 = vmatmul.mubr.bf16.gmra.mxu0 %v797
        %v833 = vpop.f32.mrf.mxu0
        %v834 = vadd.f32 0.0, %v833
        %v835 = vpop.f32.mrf.mxu0
        %v836 = vpop.f32.mrf.mxu0
        %v837 = vpop.f32.mrf.mxu0
        %838 = vdwg.mxu0
        %vm839 = vcmask 125952
        %840 = vst.msk [vmem:[%s308] sm:$0xf] %vm839, %v834
        %s841 = sand.u32 %s196, 1
        %s842 = scalar_lea.sflag [#allocation9], %s841
        %s843 = sand.u32 %s196, 1
        %s844 = smul.addr %s843, 4
        %s845 = scalar_lea.vmem [#allocation10], %s844
        // Predicated region
        $region53: #{tpu_custom_call.1} parent=47 // pred_check
          %p846 = pneg %p206
        $region54: #{tpu_custom_call.1} parent=47 // pred_check_branch
          %848 = sbr.rel (%p846) target = $region56
        $region55: #{tpu_custom_call.1} parent=47 // pred_region
          %s850 = ssub.s32 64, 64
          %851 = vsyncadd %s842, %s850
          %s852 = smul.addr %s36, 64
          %s853 = scalar_lea.hbm %s9, %s852
          %s855 = sshll.u32 %s845, 4
          %s856 = int_to_ptr.vmem [resolvable:$true] %s855
          %858 = dma.vmem_to_hbm [thread:$0]  %s856, 64, %s853, %s842
        $region56: #{tpu_custom_call.1} parent=47 // pred_fallthru
          _
      $region48: #{tpu_custom_call.1} parent=5 // pred_fallthru
        _
      %p859 = scmp.le.s32.totalorder 2, %s31
      // Predicated region
      $region57: #{tpu_custom_call.1} parent=5 // pred_check
        %p860 = pneg %p859
      $region58: #{tpu_custom_call.1} parent=5 // pred_check_branch
        %862 = sbr.rel (%p860) target = $region60
      $region59: #{tpu_custom_call.1} parent=5 // pred_region
        %s863 = ssub.s32 %s31, 2
        // Predicated region
        $region61: #{tpu_custom_call.1} parent=59 // pred_check
          %p864 = pneg %p212
        $region62: #{tpu_custom_call.1} parent=59 // pred_check_branch
          %866 = sbr.rel (%p864) target = $region64
        $region63: #{tpu_custom_call.1} parent=59 // pred_region
          %s867 = sand.u32 %s197, 1
          %s868 = scalar_lea.sflag [#allocation9], %s867
          %s869 = sand.u32 %s197, 1
          %s870 = smul.addr %s869, 4
          %s871 = scalar_lea.vmem [#allocation10], %s870
          %872 = dma.done %s868, 64
        $region64: #{tpu_custom_call.1} parent=59 // pred_fallthru
          _
      $region60: #{tpu_custom_call.1} parent=5 // pred_fallthru
        _
    $region6: #{tpu_custom_call.1} parent=1 // loop_footer
      %s35 = sadd.s32 1, %s31
    $region7: #{tpu_custom_call.1} parent=1 // loop_footer_branch
      %30 = sbr.rel target = $region3
    $region8: #{tpu_custom_call.1} parent=1 // loop_exit
      _
    %873 = vsyncpa [#allocation8], 1
    %s874 = scalar_lea.sflag [#allocation8], 1
    %875 = vsyncpa %s874, 1
    %876 = vsyncpa [#allocation9], 1
    %s877 = scalar_lea.sflag [#allocation9], 1
    %878 = vsyncpa %s877, 1

// kernel: tpu_custom_call.1
$region0: #{tpu_custom_call.1}
  #allocation0 [shape = 'u32[]', space=smem, size = 0x4, offset = 0x4, fixed_abs, tag = 'smem constant byte address 0x4 - core index']
  #allocation1 [shape = 'u32[144,128]{1,0:T(1,128)}', space=vmem, size = 0x12000, scoped, tag = 'internal scratch']
  #allocation2 [shape = 'bf16[32,32]{1,0:T(8,128)(2,1)}', space=vmem, size = 0x2000, scoped, tag = 'scratch operand']
  #allocation3 [shape = 'bf16[32,32]{1,0:T(8,128)(2,1)}', space=vmem, size = 0x2000, scoped, tag = 'scratch operand']
  #allocation4 [shape = 's32[1]{0}', space=sflag, size = 0x4, scoped, tag = 'scoped memory for tpu_custom_call.1']
  #allocation5 [shape = 'u8[512]{0}', space=smem, size = 0x200, scoped, tag = 'prefetched SMEM operand 0']
  #allocation6 [shape = 'u8[512]{0}', space=smem, size = 0x200, scoped, tag = 'prefetched SMEM operand 1']
  %s0 = inlined_call_operand.vmem [shape: f32[4], index: 0, kind: input, shape index: {}]
  %s1 = inlined_call_operand.vmem [shape: f32[4], index: 1, kind: input, shape index: {}]
  %s2 = inlined_call_operand.hbm [shape: bf16[2,4,32,32], index: 2, kind: input, shape index: {}]
  %s3 = inlined_call_operand.vmem [shape: bf16[32,16], index: 3, kind: input, shape index: {}]
  %s4 = inlined_call_operand.vmem [shape: f32[1,16], index: 4, kind: input, shape index: {}]
  %s5 = inlined_call_operand.vmem [shape: bf16[32,16], index: 5, kind: input, shape index: {}]
  %s6 = inlined_call_operand.vmem [shape: f32[1,16], index: 6, kind: input, shape index: {}]
  %s7 = inlined_call_operand.vmem [shape: bf16[16,4], index: 7, kind: input, shape index: {}]
  %s8 = inlined_call_operand.vmem [shape: f32[1,4], index: 8, kind: input, shape index: {}]
  %s9 = inlined_call_operand.hbm [shape: f32[2,4,16], index: 9, kind: output, shape index: {}]
  %s10 = sld [smem:[#allocation0]]
  $region65: #{tpu_custom_call.1} parent=0
    _
  %s12 = ssub.s32 1, %s10
  %s13 = scalar_select 0, %s12, %s10
  %s14 = sshll.u32 %s0, 4
  %s15 = int_to_ptr.vmem [resolvable:$true] %s14
  %17 = dma.vmem_to_smem %s15, 16, [#allocation5], [#allocation4]
  %s18 = sshll.u32 %s1, 4
  %s19 = int_to_ptr.vmem [resolvable:$true] %s18
  %21 = dma.vmem_to_smem %s19, 16, [#allocation6], [#allocation4]
  %22 = dma.done [#allocation4], 32
  %23 = sfence
  $region1: #{tpu_custom_call.1} parent=0
    #allocation7 [shape = 'u8[65536]{0}', space=vmem, size = 0x10000, scoped, tag = 'input window, operand 2']
    #allocation8 [shape = 's32[2]{0}', space=sflag, size = 0x8, scoped, tag = 'scoped memory for tpu_custom_call.1']
    #allocation9 [shape = 's32[2]{0}', space=sflag, size = 0x8, scoped, tag = 'scoped memory for tpu_custom_call.1']
    #allocation10 [shape = 'u8[4096]{0}', space=vmem, size = 0x1000, scoped, tag = 'output window, operand 0']
    %24 = vsyncpa [#allocation8], 0
    %s25 = scalar_lea.sflag [#allocation8], 1
    %26 = vsyncpa %s25, 0
    %27 = vsyncpa [#allocation9], 0
    %s28 = scalar_lea.sflag [#allocation9], 1
    %29 = vsyncpa %s28, 0
    loop: start=0, step=1, limit=4
    $region2: #{tpu_custom_call.1} parent=1 // loop_pre_header
      _
    $region3: #{tpu_custom_call.1} parent=1 // loop_header
      %s31 = sphi 0, %s35
      %p32 = scmp.ge.s32.totalorder %s31, 4
      %s41 = sphi 0, %s43
      %s44 = sphi 0, %s41
      %s45 = sphi 0, %s44
      %s61 = sphi 0, %s45
      %s65 = sphi 0, %s65
      %s67 = sphi 0, %s65
      %s68 = sphi 0, %s67
      %s82 = sphi 0, %s68
      %s86 = sphi 0, %s86
      %s88 = sphi 0, %s86
      %s89 = sphi 0, %s88
      %s103 = sphi 0, %s89
      %s107 = sphi 0, %s107
      %s109 = sphi 0, %s107
      %s110 = sphi 0, %s109
      %s124 = sphi 0, %s110
      %s128 = sphi 0, %s128
      %s130 = sphi 0, %s128
      %s131 = sphi 0, %s130
      %s145 = sphi 0, %s131
      %s149 = sphi 0, %s149
      %s151 = sphi 0, %s149
      %s152 = sphi 0, %s151
      %s166 = sphi 0, %s152
      %s170 = sphi 0, %s170
      %s172 = sphi 0, %s170
      %s173 = sphi 0, %s172
      %s187 = sphi 0, %s173
      %s193 = sphi 0, %s195
      %s196 = sphi 0, %s193
      %s197 = sphi 0, %s196
      %s213 = sphi 0, %s197
    $region4: #{tpu_custom_call.1} parent=1 // loop_header_branch
      %34 = sbr.rel (%p32) target = $region8
    $region5: #{tpu_custom_call.1} parent=1 // loop_body
      %s36 = ssub.s32 %s31, 1
      %s37 = ssub.s32 %s31, 2
      %s38 = sadd.s32 %s31, 1
      %s39 = ssub.s32 %s31, %s38
      %p40 = scmp.eq.s32.totalorder %s39, 0
      %s42 = sadd.s32 %s41, 1
      %s43 = scalar_select %p40, %s41, %s42
      %p46 = pneg %p40
      %p47 = scmp.eq.s32.totalorder %s31, 1
      %p48 = por %p46, %p47
      %p49 = scmp.ne.s32.totalorder %s41, %s44
      %p50 = scmp.eq.s32.totalorder %s31, 0
      %p51 = por %p49, %p50
      %p52 = scmp.ne.s32.totalorder %s41, %s44
      %p53 = scmp.eq.s32.totalorder %s36, 1
      %p54 = por %p52, %p53
      %p55 = scmp.ne.s32.totalorder %s44, %s45
      %p56 = scmp.eq.s32.totalorder %s36, 0
      %p57 = por %p55, %p56
      %p58 = scmp.ne.s32.totalorder %s44, %s45
      %p59 = scmp.eq.s32.totalorder %s37, 1
      %p60 = por %p58, %p59
      %p62 = scmp.ne.s32.totalorder %s45, %s61
      %p63 = scmp.eq.s32.totalorder %s37, 0
      %p64 = por %p62, %p63
      %s66 = sadd.s32 %s65, 1
      %p69 = scmp.eq.s32.totalorder %s31, 1
      %p70 = scmp.ne.s32.totalorder %s65, %s67
      %p71 = scmp.eq.s32.totalorder %s31, 0
      %p72 = por %p70, %p71
      %p73 = scmp.ne.s32.totalorder %s65, %s67
      %p74 = scmp.eq.s32.totalorder %s36, 1
      %p75 = por %p73, %p74
      %p76 = scmp.ne.s32.totalorder %s67, %s68
      %p77 = scmp.eq.s32.totalorder %s36, 0
      %p78 = por %p76, %p77
      %p79 = scmp.ne.s32.totalorder %s67, %s68
      %p80 = scmp.eq.s32.totalorder %s37, 1
      %p81 = por %p79, %p80
      %p83 = scmp.ne.s32.totalorder %s68, %s82
      %p84 = scmp.eq.s32.totalorder %s37, 0
      %p85 = por %p83, %p84
      %s87 = sadd.s32 %s86, 1
      %p90 = scmp.eq.s32.totalorder %s31, 1
      %p91 = scmp.ne.s32.totalorder %s86, %s88
      %p92 = scmp.eq.s32.totalorder %s31, 0
      %p93 = por %p91, %p92
      %p94 = scmp.ne.s32.totalorder %s86, %s88
      %p95 = scmp.eq.s32.totalorder %s36, 1
      %p96 = por %p94, %p95
      %p97 = scmp.ne.s32.totalorder %s88, %s89
      %p98 = scmp.eq.s32.totalorder %s36, 0
      %p99 = por %p97, %p98
      %p100 = scmp.ne.s32.totalorder %s88, %s89
      %p101 = scmp.eq.s32.totalorder %s37, 1
      %p102 = por %p100, %p101
      %p104 = scmp.ne.s32.totalorder %s89, %s103
      %p105 = scmp.eq.s32.totalorder %s37, 0
      %p106 = por %p104, %p105
      %s108 = sadd.s32 %s107, 1
      %p111 = scmp.eq.s32.totalorder %s31, 1
      %p112 = scmp.ne.s32.totalorder %s107, %s109
      %p113 = scmp.eq.s32.totalorder %s31, 0
      %p114 = por %p112, %p113
      %p115 = scmp.ne.s32.totalorder %s107, %s109
      %p116 = scmp.eq.s32.totalorder %s36, 1
      %p117 = por %p115, %p116
      %p118 = scmp.ne.s32.totalorder %s109, %s110
      %p119 = scmp.eq.s32.totalorder %s36, 0
      %p120 = por %p118, %p119
      %p121 = scmp.ne.s32.totalorder %s109, %s110
      %p122 = scmp.eq.s32.totalorder %s37, 1
      %p123 = por %p121, %p122
      %p125 = scmp.ne.s32.totalorder %s110, %s124
      %p126 = scmp.eq.s32.totalorder %s37, 0
      %p127 = por %p125, %p126
      %s129 = sadd.s32 %s128, 1
      %p132 = scmp.eq.s32.totalorder %s31, 1
      %p133 = scmp.ne.s32.totalorder %s128, %s130
      %p134 = scmp.eq.s32.totalorder %s31, 0
      %p135 = por %p133, %p134
      %p136 = scmp.ne.s32.totalorder %s128, %s130
      %p137 = scmp.eq.s32.totalorder %s36, 1
      %p138 = por %p136, %p137
      %p139 = scmp.ne.s32.totalorder %s130, %s131
      %p140 = scmp.eq.s32.totalorder %s36, 0
      %p141 = por %p139, %p140
      %p142 = scmp.ne.s32.totalorder %s130, %s131
      %p143 = scmp.eq.s32.totalorder %s37, 1
      %p144 = por %p142, %p143
      %p146 = scmp.ne.s32.totalorder %s131, %s145
      %p147 = scmp.eq.s32.totalorder %s37, 0
      %p148 = por %p146, %p147
      %s150 = sadd.s32 %s149, 1
      %p153 = scmp.eq.s32.totalorder %s31, 1
      %p154 = scmp.ne.s32.totalorder %s149, %s151
      %p155 = scmp.eq.s32.totalorder %s31, 0
      %p156 = por %p154, %p155
      %p157 = scmp.ne.s32.totalorder %s149, %s151
      %p158 = scmp.eq.s32.totalorder %s36, 1
      %p159 = por %p157, %p158
      %p160 = scmp.ne.s32.totalorder %s151, %s152
      %p161 = scmp.eq.s32.totalorder %s36, 0
      %p162 = por %p160, %p161
      %p163 = scmp.ne.s32.totalorder %s151, %s152
      %p164 = scmp.eq.s32.totalorder %s37, 1
      %p165 = por %p163, %p164
      %p167 = scmp.ne.s32.totalorder %s152, %s166
      %p168 = scmp.eq.s32.totalorder %s37, 0
      %p169 = por %p167, %p168
      %s171 = sadd.s32 %s170, 1
      %p174 = scmp.eq.s32.totalorder %s31, 1
      %p175 = scmp.ne.s32.totalorder %s170, %s172
      %p176 = scmp.eq.s32.totalorder %s31, 0
      %p177 = por %p175, %p176
      %p178 = scmp.ne.s32.totalorder %s170, %s172
      %p179 = scmp.eq.s32.totalorder %s36, 1
      %p180 = por %p178, %p179
      %p181 = scmp.ne.s32.totalorder %s172, %s173
      %p182 = scmp.eq.s32.totalorder %s36, 0
      %p183 = por %p181, %p182
      %p184 = scmp.ne.s32.totalorder %s172, %s173
      %p185 = scmp.eq.s32.totalorder %s37, 1
      %p186 = por %p184, %p185
      %p188 = scmp.ne.s32.totalorder %s173, %s187
      %p189 = scmp.eq.s32.totalorder %s37, 0
      %p190 = por %p188, %p189
      %s191 = ssub.s32 %s31, %s38
      %p192 = scmp.eq.s32.totalorder %s191, 0
      %s194 = sadd.s32 %s193, 1
      %s195 = scalar_select %p192, %s193, %s194
      %p198 = pneg %p192
      %p199 = scmp.eq.s32.totalorder %s31, 1
      %p200 = por %p198, %p199
      %p201 = scmp.ne.s32.totalorder %s193, %s196
      %p202 = scmp.eq.s32.totalorder %s31, 0
      %p203 = por %p201, %p202
      %p204 = scmp.ne.s32.totalorder %s193, %s196
      %p205 = scmp.eq.s32.totalorder %s36, 1
      %p206 = por %p204, %p205
      %p207 = scmp.ne.s32.totalorder %s196, %s197
      %p208 = scmp.eq.s32.totalorder %s36, 0
      %p209 = por %p207, %p208
      %p210 = scmp.ne.s32.totalorder %s196, %s197
      %p211 = scmp.eq.s32.totalorder %s37, 1
      %p212 = por %p210, %p211
      %p214 = scmp.ne.s32.totalorder %s197, %s213
      %p215 = scmp.eq.s32.totalorder %s37, 0
      %p216 = por %p214, %p215
      %p217 = scmp.le.s32.totalorder 1, %s31
      %p218 = scmp.lt.s32.totalorder %s31, 3
      %p219 = pnand %p217, %p218
      %p220 = pneg %p219
      // Predicated region
      $region9: #{tpu_custom_call.1} parent=5 // pred_check
        _
      $region10: #{tpu_custom_call.1} parent=5 // pred_check_branch
        %222 = sbr.rel (%p219) target = $region12
      $region11: #{tpu_custom_call.1} parent=5 // pred_region
        %s223 = ssub.s32 %s31, 1
        // Predicated region
        $region13: #{tpu_custom_call.1} parent=11 // pred_check
          %p224 = pneg %p78
        $region14: #{tpu_custom_call.1} parent=11 // pred_check_branch
          %226 = sbr.rel (%p224) target = $region16
        $region15: #{tpu_custom_call.1} parent=11 // pred_region
          _
        $region16: #{tpu_custom_call.1} parent=11 // pred_fallthru
          _
        // Predicated region
        $region17: #{tpu_custom_call.1} parent=11 // pred_check
          %p227 = pneg %p99
        $region18: #{tpu_custom_call.1} parent=11 // pred_check_branch
          %229 = sbr.rel (%p227) target = $region20
        $region19: #{tpu_custom_call.1} parent=11 // pred_region
          _
        $region20: #{tpu_custom_call.1} parent=11 // pred_fallthru
          _
        // Predicated region
        $region21: #{tpu_custom_call.1} parent=11 // pred_check
          %p230 = pneg %p120
        $region22: #{tpu_custom_call.1} parent=11 // pred_check_branch
          %232 = sbr.rel (%p230) target = $region24
        $region23: #{tpu_custom_call.1} parent=11 // pred_region
          _
        $region24: #{tpu_custom_call.1} parent=11 // pred_fallthru
          _
        // Predicated region
        $region25: #{tpu_custom_call.1} parent=11 // pred_check
          %p233 = pneg %p141
        $region26: #{tpu_custom_call.1} parent=11 // pred_check_branch
          %235 = sbr.rel (%p233) target = $region28
        $region27: #{tpu_custom_call.1} parent=11 // pred_region
          _
        $region28: #{tpu_custom_call.1} parent=11 // pred_fallthru
          _
        // Predicated region
        $region29: #{tpu_custom_call.1} parent=11 // pred_check
          %p236 = pneg %p162
        $region30: #{tpu_custom_call.1} parent=11 // pred_check_branch
          %238 = sbr.rel (%p236) target = $region32
        $region31: #{tpu_custom_call.1} parent=11 // pred_region
          _
        $region32: #{tpu_custom_call.1} parent=11 // pred_fallthru
          _
        // Predicated region
        $region33: #{tpu_custom_call.1} parent=11 // pred_check
          %p239 = pneg %p183
        $region34: #{tpu_custom_call.1} parent=11 // pred_check_branch
          %241 = sbr.rel (%p239) target = $region36
        $region35: #{tpu_custom_call.1} parent=11 // pred_region
          _
        $region36: #{tpu_custom_call.1} parent=11 // pred_fallthru
          _
      $region12: #{tpu_custom_call.1} parent=5 // pred_fallthru
        _
      %p242 = scmp.lt.s32.totalorder %s31, 2
      // Predicated region
      $region37: #{tpu_custom_call.1} parent=5 // pred_check
        %p243 = pneg %p242
      $region38: #{tpu_custom_call.1} parent=5 // pred_check_branch
        %245 = sbr.rel (%p243) target = $region40
      $region39: #{tpu_custom_call.1} parent=5 // pred_region
        // Predicated region
        $region41: #{tpu_custom_call.1} parent=39 // pred_check
          %p246 = pneg %p51
        $region42: #{tpu_custom_call.1} parent=39 // pred_check_branch
          %248 = sbr.rel (%p246) target = $region44
        $region43: #{tpu_custom_call.1} parent=39 // pred_region
          %s249 = sand.u32 %s41, 1
          %s250 = scalar_lea.sflag [#allocation8], %s249
          %s251 = sand.u32 %s41, 1
          %s252 = smul.addr %s251, 64
          %s253 = scalar_lea.vmem [#allocation7], %s252
          %s255 = ssub.s32 1024, 1024
          %256 = vsyncadd %s250, %s255
          %s257 = smul.addr %s31, 16
          %s258 = smul.addr %s257, 64
          %s259 = scalar_lea.hbm %s2, %s258
          %s260 = sshll.u32 %s253, 4
          %s261 = int_to_ptr.vmem [resolvable:$true] %s260
          %266 = dma.hbm_to_vmem [thread:$0]  %s259, 1024, %s261, %s250, 64, 64, 4
        $region44: #{tpu_custom_call.1} parent=39 // pred_fallthru
          _
      $region40: #{tpu_custom_call.1} parent=5 // pred_fallthru
        _
      %p267 = scmp.le.s32.totalorder 1, %s31
      %p268 = scmp.lt.s32.totalorder %s31, 3
      %p269 = pnand %p267, %p268
      %p270 = pneg %p269
      // Predicated region
      $region45: #{tpu_custom_call.1} parent=5 // pred_check
        _
      $region46: #{tpu_custom_call.1} parent=5 // pred_check_branch
        %272 = sbr.rel (%p269) target = $region48
      $region47: #{tpu_custom_call.1} parent=5 // pred_region
        %s273 = ssub.s32 %s31, 1
        %s274 = sand.u32 %s44, 1
        %s275 = scalar_lea.sflag [#allocation8], %s274
        %s276 = sand.u32 %s44, 1
        %s277 = smul.addr %s276, 64
        %s278 = scalar_lea.vmem [#allocation7], %s277
        // Predicated region
        $region49: #{tpu_custom_call.1} parent=47 // pred_check
          %p279 = pneg %p57
        $region50: #{tpu_custom_call.1} parent=47 // pred_check_branch
          %281 = sbr.rel (%p279) target = $region52
        $region51: #{tpu_custom_call.1} parent=47 // pred_region
          %282 = dma.done %s275, 1024
        $region52: #{tpu_custom_call.1} parent=47 // pred_fallthru
          _
        %s283 = sand.u32 %s44, 1
        %s284 = scalar_lea.sflag [#allocation8], %s283
        %s285 = sand.u32 %s44, 1
        %s286 = smul.addr %s285, 64
        %s287 = scalar_lea.vmem [#allocation7], %s286
        %p288 = pneg %p57
        %p289 = pneg %p54
        %p290 = pneg %p78
        %p291 = pneg %p75
        %p292 = pneg %p99
        %p293 = pneg %p96
        %p294 = pneg %p120
        %p295 = pneg %p117
        %p296 = pneg %p141
        %p297 = pneg %p138
        %p298 = pneg %p162
        %p299 = pneg %p159
        %p300 = pneg %p183
        %p301 = pneg %p180
        %p302 = pneg %p209
        %p303 = pneg %p206
        %s304 = sand.u32 %s196, 1
        %s305 = scalar_lea.sflag [#allocation9], %s304
        %s306 = sand.u32 %s196, 1
        %s307 = smul.addr %s306, 4
        %s308 = scalar_lea.vmem [#allocation10], %s307
        %v310 = vld [vmem:[%s278] sm:$0xf]
        %v311 = vld [vmem:[%s278 + $0x4] sm:$0xf]
        %v312 = vunpack.c.l.bf16 %v310
        %v313 = vunpack.c.l.bf16 %v311
        %s314 = sld [smem:[#allocation5]]
        %v315 = vstv %s314
        %v316 = vmul.f32 %v312, %v315
        %v317 = vmul.f32 %v313, %v315
        %s318 = sld [smem:[#allocation6]]
        %v319 = vstv %s318
        %v320 = vmul.f32 %v312, %v319
        %v321 = vmul.f32 %v313, %v319
        %s322 = scalar_lea.vmem %s278, 16 [#allocation7]
        %v323 = vld [vmem:[%s322] sm:$0xf]
        %v324 = vld [vmem:[%s322 + $0x4] sm:$0xf]
        %v325 = vunpack.c.l.bf16 %v323
        %v326 = vunpack.c.l.bf16 %v324
        %s327 = sld [smem:[#allocation5 + $0x1]]
        %v328 = vstv %s327
        %v329 = vmul.f32 %v325, %v328
        %v330 = vmul.f32 %v326, %v328
        %v331 = vadd.f32 %v316, %v329
        %v332 = vadd.f32 %v317, %v330
        %s333 = sld [smem:[#allocation6 + $0x1]]
        %v334 = vstv %s333
        %v335 = vmul.f32 %v325, %v334
        %v336 = vmul.f32 %v326, %v334
        %v337 = vadd.f32 %v320, %v335
        %v338 = vadd.f32 %v321, %v336
        %s339 = scalar_lea.vmem %s278, 32 [#allocation7]
        %v340 = vld [vmem:[%s339] sm:$0xf]
        %v341 = vld [vmem:[%s339 + $0x4] sm:$0xf]
        %v342 = vunpack.c.l.bf16 %v340
        %v343 = vunpack.c.l.bf16 %v341
        %s344 = sld [smem:[#allocation5 + $0x2]]
        %v345 = vstv %s344
        %v346 = vmul.f32 %v342, %v345
        %v347 = vmul.f32 %v343, %v345
        %v348 = vadd.f32 %v331, %v346
        %v349 = vadd.f32 %v332, %v347
        %s350 = sld [smem:[#allocation6 + $0x2]]
        %v351 = vstv %s350
        %v352 = vmul.f32 %v342, %v351
        %v353 = vmul.f32 %v343, %v351
        %v354 = vadd.f32 %v337, %v352
        %v355 = vadd.f32 %v338, %v353
        %s356 = scalar_lea.vmem %s278, 48 [#allocation7]
        %v357 = vld [vmem:[%s356] sm:$0xf]
        %v358 = vld [vmem:[%s356 + $0x4] sm:$0xf]
        %v359 = vunpack.c.l.bf16 %v357
        %v360 = vunpack.c.l.bf16 %v358
        %s361 = sld [smem:[#allocation5 + $0x3]]
        %v362 = vstv %s361
        %v363 = vmul.f32 %v359, %v362
        %v364 = vmul.f32 %v360, %v362
        %v365 = vadd.f32 %v348, %v363
        %v366 = vadd.f32 %v349, %v364
        %s367 = sld [smem:[#allocation6 + $0x3]]
        %v368 = vstv %s367
        %v369 = vmul.f32 %v359, %v368
        %v370 = vmul.f32 %v360, %v368
        %v371 = vadd.f32 %v354, %v369
        %v372 = vadd.f32 %v355, %v370
        %v373 = vpack.c.bf16 %v366, %v365
        %v375 = vunpack.c.l.b16 %v373
        %v376 = vunpack.c.h.b16 %v373
        %v377 = vpack.c.b16 %v375, %v375
        %v378 = vpack.c.b16 %v376, %v376
        %vm381 = vcmask 257024
        %382 = vst.msk [vmem:[#allocation2] sm:$0xf] %vm381, %v377
        %383 = vst.msk [vmem:[#allocation2 + $0x4] sm:$0xf] %vm381, %v378
        %v384 = vpack.c.bf16 %v372, %v371
        %v386 = vunpack.c.l.b16 %v384
        %v387 = vunpack.c.h.b16 %v384
        %v388 = vpack.c.b16 %v386, %v386
        %v389 = vpack.c.b16 %v387, %v387
        %392 = vst.msk [vmem:[#allocation3] sm:$0xf] %vm381, %v388
        %393 = vst.msk [vmem:[#allocation3 + $0x4] sm:$0xf] %vm381, %v389
        %v394 = vld [vmem:[%s278 + $0x8] sm:$0xf]
        %v395 = vld [vmem:[%s278 + $0xc] sm:$0xf]
        %v396 = vunpack.c.l.bf16 %v394
        %v397 = vunpack.c.l.bf16 %v395
        %s398 = sld [smem:[#allocation5]]
        %v399 = vstv %s398
        %v400 = vmul.f32 %v396, %v399
        %v401 = vmul.f32 %v397, %v399
        %s402 = sld [smem:[#allocation6]]
        %v403 = vstv %s402
        %v404 = vmul.f32 %v396, %v403
        %v405 = vmul.f32 %v397, %v403
        %v406 = vld [vmem:[%s322 + $0x8] sm:$0xf]
        %v407 = vld [vmem:[%s322 + $0xc] sm:$0xf]
        %v408 = vunpack.c.l.bf16 %v406
        %v409 = vunpack.c.l.bf16 %v407
        %s410 = sld [smem:[#allocation5 + $0x1]]
        %v411 = vstv %s410
        %v412 = vmul.f32 %v408, %v411
        %v413 = vmul.f32 %v409, %v411
        %v414 = vadd.f32 %v400, %v412
        %v415 = vadd.f32 %v401, %v413
        %s416 = sld [smem:[#allocation6 + $0x1]]
        %v417 = vstv %s416
        %v418 = vmul.f32 %v408, %v417
        %v419 = vmul.f32 %v409, %v417
        %v420 = vadd.f32 %v404, %v418
        %v421 = vadd.f32 %v405, %v419
        %v422 = vld [vmem:[%s339 + $0x8] sm:$0xf]
        %v423 = vld [vmem:[%s339 + $0xc] sm:$0xf]
        %v424 = vunpack.c.l.bf16 %v422
        %v425 = vunpack.c.l.bf16 %v423
        %s426 = sld [smem:[#allocation5 + $0x2]]
        %v427 = vstv %s426
        %v428 = vmul.f32 %v424, %v427
        %v429 = vmul.f32 %v425, %v427
        %v430 = vadd.f32 %v414, %v428
        %v431 = vadd.f32 %v415, %v429
        %s432 = sld [smem:[#allocation6 + $0x2]]
        %v433 = vstv %s432
        %v434 = vmul.f32 %v424, %v433
        %v435 = vmul.f32 %v425, %v433
        %v436 = vadd.f32 %v420, %v434
        %v437 = vadd.f32 %v421, %v435
        %v438 = vld [vmem:[%s356 + $0x8] sm:$0xf]
        %v439 = vld [vmem:[%s356 + $0xc] sm:$0xf]
        %v440 = vunpack.c.l.bf16 %v438
        %v441 = vunpack.c.l.bf16 %v439
        %s442 = sld [smem:[#allocation5 + $0x3]]
        %v443 = vstv %s442
        %v444 = vmul.f32 %v440, %v443
        %v445 = vmul.f32 %v441, %v443
        %v446 = vadd.f32 %v430, %v444
        %v447 = vadd.f32 %v431, %v445
        %s448 = sld [smem:[#allocation6 + $0x3]]
        %v449 = vstv %s448
        %v450 = vmul.f32 %v440, %v449
        %v451 = vmul.f32 %v441, %v449
        %v452 = vadd.f32 %v436, %v450
        %v453 = vadd.f32 %v437, %v451
        %v454 = vpack.c.bf16 %v447, %v446
        %v456 = vunpack.c.l.b16 %v454
        %v457 = vunpack.c.h.b16 %v454
        %v458 = vpack.c.b16 %v456, %v456
        %v459 = vpack.c.b16 %v457, %v457
        %462 = vst.msk [vmem:[#allocation2 + $0x8] sm:$0xf] %vm381, %v458
        %463 = vst.msk [vmem:[#allocation2 + $0xc] sm:$0xf] %vm381, %v459
        %v464 = vpack.c.bf16 %v453, %v452
        %v466 = vunpack.c.l.b16 %v464
        %v467 = vunpack.c.h.b16 %v464
        %v468 = vpack.c.b16 %v466, %v466
        %v469 = vpack.c.b16 %v467, %v467
        %472 = vst.msk [vmem:[#allocation3 + $0x8] sm:$0xf] %vm381, %v468
        %473 = vst.msk [vmem:[#allocation3 + $0xc] sm:$0xf] %vm381, %v469
        %v474 = vld [vmem:[#allocation2] sm:$0xf]
        %v475 = vld [vmem:[#allocation2 + $0x4] sm:$0xf]
        %v476 = vld [vmem:[#allocation2 + $0x8] sm:$0xf]
        %v477 = vld [vmem:[#allocation2 + $0xc] sm:$0xf]
        %v478 = vld [vmem:[%s3] sm:$0xf]
        %v479 = vld [vmem:[%s3 + $0x4] sm:$0xf]
        %v480 = vld [vmem:[%s3 + $0x8] sm:$0xf]
        %v481 = vld [vmem:[%s3 + $0xc] sm:$0xf]
        %v482 = vld [vmem:[%s4] sm:$0x1]
        %v484 = vlaneseq
        %v485 = vshrl.u32 %v484, 7
        %v486 = vsub.s32 0, %v485
        %v487 = vrot.slane %v482, %v486
        %v493 = vunpack.c.l.b16 %v474
        %v494 = vunpack.c.l.b16 %v475
        %v495 = vunpack.c.l.b16 %v476
        %v496 = vunpack.c.l.b16 %v477
        %v497 = vpack.c.b16 %v494, %v493
        %v498 = vpack.c.b16 %v496, %v495
        %v503 = vunpack.c.l.b16 %v478
        %v504 = vunpack.c.l.b16 %v479
        %v505 = vunpack.c.l.b16 %v480
        %v506 = vunpack.c.l.b16 %v481
        %v507 = vpack.c.b16 %v504, %v503
        %v508 = vpack.c.b16 %v506, %v505
        %vm511 = vcmask 261120
        %v513 = vsel %vm511, %v497, 0
        %v516 = vsel %vm511, %v498, 0
        %518 = vmatprep.subr.bf16.mxu0 0
        %519 = vmatpush1.bf16.msra.mxu0 0
        %520 = vmatprep.subr.bf16.mxu0 0
        %521 = vmatpush1.bf16.msra.mxu0 0
        %522 = vmatprep.subr.bf16.mxu0 0
        %523 = vmatpush1.bf16.msra.mxu0 0
        %524 = vmatprep.subr.bf16.mxu0 0
        %525 = vmatpush1.bf16.msra.mxu0 0
        %526 = vmatprep.subr.bf16.mxu0 0
        %527 = vmatpush1.bf16.msra.mxu0 0
        %528 = vmatprep.subr.bf16.mxu0 0
        %529 = vmatpush1.bf16.msra.mxu0 0
        %530 = vmatprep.subr.bf16.mxu0 0
        %531 = vmatpush1.bf16.msra.mxu0 %v508
        %532 = vmatprep.subr.bf16.mxu0 0
        %533 = vmatpush1.bf16.msra.mxu0 %v507
        %534 = vmatprep.subr.bf16.mxu0 0
        %535 = vmatpush2.bf16.msra.mxu0 0
        %536 = vmatprep.subr.bf16.mxu0 0
        %537 = vmatpush2.bf16.msra.mxu0 0
        %538 = vmatprep.subr.bf16.mxu0 0
        %539 = vmatpush2.bf16.msra.mxu0 0
        %540 = vmatprep.subr.bf16.mxu0 0
        %541 = vmatpush2.bf16.msra.mxu0 0
        %542 = vmatprep.subr.bf16.mxu0 0
        %543 = vmatpush2.bf16.msra.mxu0 0
        %544 = vmatprep.subr.bf16.mxu0 0
        %545 = vmatpush2.bf16.msra.mxu0 0
        %546 = vmatprep.subr.bf16.mxu0 0
        %547 = vmatpush2.bf16.msra.mxu0 0
        %548 = vmatprep.subr.bf16.mxu0 0
        %549 = vmatpush2.bf16.msra.mxu0 0
        %550 = vmatprep.mubr.bf16.mxu0 0
        %551 = vmatmul.mubr.bf16.gmra.mxu0 %v513
        %v552 = vpop.f32.mrf.mxu0
        %v553 = vadd.f32 %v487, %v552
        %v554 = vpop.f32.mrf.mxu0
        %v555 = vpop.f32.mrf.mxu0
        %v556 = vadd.f32 %v487, %v555
        %v557 = vpop.f32.mrf.mxu0
        %558 = vmatprep.mubr.bf16.mxu0 0
        %559 = vmatmul.mubr.bf16.gmra.mxu0 %v516
        %v560 = vpop.f32.mrf.mxu0
        %v561 = vadd.f32 %v487, %v560
        %v562 = vpop.f32.mrf.mxu0
        %v563 = vpop.f32.mrf.mxu0
        %v564 = vadd.f32 %v487, %v563
        %v565 = vpop.f32.mrf.mxu0
        %566 = vdwg.mxu0
        %v567 = vld [vmem:[#allocation3] sm:$0xf]
        %v568 = vld [vmem:[#allocation3 + $0x4] sm:$0xf]
        %v569 = vld [vmem:[#allocation3 + $0x8] sm:$0xf]
        %v570 = vld [vmem:[#allocation3 + $0xc] sm:$0xf]
        %v571 = vld [vmem:[%s5] sm:$0xf]
        %v572 = vld [vmem:[%s5 + $0x4] sm:$0xf]
        %v573 = vld [vmem:[%s5 + $0x8] sm:$0xf]
        %v574 = vld [vmem:[%s5 + $0xc] sm:$0xf]
        %v575 = vld [vmem:[%s6] sm:$0x1]
        %v577 = vlaneseq
        %v578 = vshrl.u32 %v577, 7
        %v579 = vsub.s32 0, %v578
        %v580 = vrot.slane %v575, %v579
        %v586 = vunpack.c.l.b16 %v567
        %v587 = vunpack.c.l.b16 %v568
        %v588 = vunpack.c.l.b16 %v569
        %v589 = vunpack.c.l.b16 %v570
        %v590 = vpack.c.b16 %v587, %v586
        %v591 = vpack.c.b16 %v589, %v588
        %v596 = vunpack.c.l.b16 %v571
        %v597 = vunpack.c.l.b16 %v572
        %v598 = vunpack.c.l.b16 %v573
        %v599 = vunpack.c.l.b16 %v574
        %v600 = vpack.c.b16 %v597, %v596
        %v601 = vpack.c.b16 %v599, %v598
        %v605 = vsel %vm511, %v590, 0
        %v608 = vsel %vm511, %v591, 0
        %610 = vmatprep.subr.bf16.mxu0 0
        %611 = vmatpush1.bf16.msra.mxu0 0
        %612 = vmatprep.subr.bf16.mxu0 0
        %613 = vmatpush1.bf16.msra.mxu0 0
        %614 = vmatprep.subr.bf16.mxu0 0
        %615 = vmatpush1.bf16.msra.mxu0 0
        %616 = vmatprep.subr.bf16.mxu0 0
        %617 = vmatpush1.bf16.msra.mxu0 0
        %618 = vmatprep.subr.bf16.mxu0 0
        %619 = vmatpush1.bf16.msra.mxu0 0
        %620 = vmatprep.subr.bf16.mxu0 0
        %621 = vmatpush1.bf16.msra.mxu0 0
        %622 = vmatprep.subr.bf16.mxu0 0
        %623 = vmatpush1.bf16.msra.mxu0 %v601
        %624 = vmatprep.subr.bf16.mxu0 0
        %625 = vmatpush1.bf16.msra.mxu0 %v600
        %626 = vmatprep.subr.bf16.mxu0 0
        %627 = vmatpush2.bf16.msra.mxu0 0
        %628 = vmatprep.subr.bf16.mxu0 0
        %629 = vmatpush2.bf16.msra.mxu0 0
        %630 = vmatprep.subr.bf16.mxu0 0
        %631 = vmatpush2.bf16.msra.mxu0 0
        %632 = vmatprep.subr.bf16.mxu0 0
        %633 = vmatpush2.bf16.msra.mxu0 0
        %634 = vmatprep.subr.bf16.mxu0 0
        %635 = vmatpush2.bf16.msra.mxu0 0
        %636 = vmatprep.subr.bf16.mxu0 0
        %637 = vmatpush2.bf16.msra.mxu0 0
        %638 = vmatprep.subr.bf16.mxu0 0
        %639 = vmatpush2.bf16.msra.mxu0 0
        %640 = vmatprep.subr.bf16.mxu0 0
        %641 = vmatpush2.bf16.msra.mxu0 0
        %642 = vmatprep.mubr.bf16.mxu0 0
        %643 = vmatmul.mubr.bf16.gmra.mxu0 %v605
        %v644 = vpop.f32.mrf.mxu0
        %v645 = vadd.f32 %v580, %v644
        %v646 = vpop.f32.mrf.mxu0
        %v647 = vpop.f32.mrf.mxu0
        %v648 = vadd.f32 %v580, %v647
        %v649 = vpop.f32.mrf.mxu0
        %650 = vmatprep.mubr.bf16.mxu0 0
        %651 = vmatmul.mubr.bf16.gmra.mxu0 %v608
        %v652 = vpop.f32.mrf.mxu0
        %v653 = vadd.f32 %v580, %v652
        %v654 = vpop.f32.mrf.mxu0
        %v655 = vpop.f32.mrf.mxu0
        %v656 = vadd.f32 %v580, %v655
        %v657 = vpop.f32.mrf.mxu0
        %658 = vdwg.mxu0
        %v659 = vpack.c.bf16 %v556, %v553
        %v660 = vpack.c.bf16 %v564, %v561
        %v661 = vld [vmem:[%s7] sm:$0xf]
        %v662 = vld [vmem:[%s7 + $0x4] sm:$0xf]
        %v663 = vld [vmem:[%s8] sm:$0x1]
        %v665 = vlaneseq
        %v666 = vshrl.u32 %v665, 7
        %v667 = vsub.s32 0, %v666
        %v668 = vrot.slane %v663, %v667
        %v672 = vunpack.c.l.b16 %v661
        %v673 = vunpack.c.l.b16 %v662
        %v674 = vpack.c.b16 %v673, %v672
        %vm676 = vcmask 130048
        %v678 = vsel %vm676, %v659, 0
        %v681 = vsel %vm676, %v660, 0
        %683 = vmatprep.subr.bf16.mxu0 0
        %684 = vmatpush1.bf16.msra.mxu0 0
        %685 = vmatprep.subr.bf16.mxu0 0
        %686 = vmatpush1.bf16.msra.mxu0 0
        %687 = vmatprep.subr.bf16.mxu0 0
        %688 = vmatpush1.bf16.msra.mxu0 0
        %689 = vmatprep.subr.bf16.mxu0 0
        %690 = vmatpush1.bf16.msra.mxu0 0
        %691 = vmatprep.subr.bf16.mxu0 0
        %692 = vmatpush1.bf16.msra.mxu0 0
        %693 = vmatprep.subr.bf16.mxu0 0
        %694 = vmatpush1.bf16.msra.mxu0 0
        %695 = vmatprep.subr.bf16.mxu0 0
        %696 = vmatpush1.bf16.msra.mxu0 0
        %697 = vmatprep.subr.bf16.mxu0 0
        %698 = vmatpush1.bf16.msra.mxu0 %v674
        %699 = vmatprep.subr.bf16.mxu0 0
        %700 = vmatpush2.bf16.msra.mxu0 0
        %701 = vmatprep.subr.bf16.mxu0 0
        %702 = vmatpush2.bf16.msra.mxu0 0
        %703 = vmatprep.subr.bf16.mxu0 0
        %704 = vmatpush2.bf16.msra.mxu0 0
        %705 = vmatprep.subr.bf16.mxu0 0
        %706 = vmatpush2.bf16.msra.mxu0 0
        %707 = vmatprep.subr.bf16.mxu0 0
        %708 = vmatpush2.bf16.msra.mxu0 0
        %709 = vmatprep.subr.bf16.mxu0 0
        %710 = vmatpush2.bf16.msra.mxu0 0
        %711 = vmatprep.subr.bf16.mxu0 0
        %712 = vmatpush2.bf16.msra.mxu0 0
        %713 = vmatprep.subr.bf16.mxu0 0
        %714 = vmatpush2.bf16.msra.mxu0 0
        %715 = vmatprep.mubr.bf16.mxu0 0
        %716 = vmatmul.mubr.bf16.gmra.mxu0 %v678
        %v717 = vpop.f32.mrf.mxu0
        %v718 = vadd.f32 %v668, %v717
        %v719 = vpop.f32.mrf.mxu0
        %v720 = vpop.f32.mrf.mxu0
        %v721 = vadd.f32 %v668, %v720
        %v722 = vpop.f32.mrf.mxu0
        %723 = vmatprep.mubr.bf16.mxu0 0
        %724 = vmatmul.mubr.bf16.gmra.mxu0 %v681
        %v725 = vpop.f32.mrf.mxu0
        %v726 = vadd.f32 %v668, %v725
        %v727 = vpop.f32.mrf.mxu0
        %v728 = vpop.f32.mrf.mxu0
        %v729 = vadd.f32 %v668, %v728
        %v730 = vpop.f32.mrf.mxu0
        %731 = vdwg.mxu0
        %vm732 = vcmask 31744
        %v733 = vsel %vm732, %v718, -inf
        %v734 = vsel %vm732, %v721, -inf
        %v735 = vsel %vm732, %v726, -inf
        %v736 = vsel %vm732, %v729, -inf
        %v737 = vmax.f32 %v733, %v734
        %v738 = vmax.f32 %v735, %v736
        %v739 = vmax.f32 %v737, %v738
        %v740 = vrot.slane %v739, 4
        %v741 = vmax.f32 %v739, %v740
        %v742 = vrot.slane %v741, 2
        %v743 = vmax.f32 %v741, %v742
        %v744 = vrot.slane %v743, 1
        %v745 = vmax.f32 %v743, %v744
        %v746 = vsub.f32 %v718, %v745
        %v747 = vsub.f32 %v721, %v745
        %v748 = vsub.f32 %v726, %v745
        %v749 = vsub.f32 %v729, %v745
        %v750 = vmul.f32 %v746, 1.442695
        %v751 = vpow.pop %v750
        %v752 = vmul.f32 %v747, 1.442695
        %v753 = vpow.pop %v752
        %v754 = vmul.f32 %v748, 1.442695
        %v755 = vpow.pop %v754
        %v756 = vmul.f32 %v749, 1.442695
        %v757 = vpow.pop %v756
        %v758 = vsel %vm732, %v751, 0.0
        %v759 = vsel %vm732, %v753, 0.0
        %v760 = vadd.f32 %v758, %v759
        %v761 = vsel %vm732, %v755, 0.0
        %v762 = vadd.f32 %v760, %v761
        %v763 = vsel %vm732, %v757, 0.0
        %v764 = vadd.f32 %v762, %v763
        %v765 = vrot.slane %v764, 4
        %v766 = vadd.f32 %v764, %v765
        %v767 = vrot.slane %v766, 2
        %v768 = vadd.f32 %v766, %v767
        %v769 = vrot.slane %v768, 1
        %v770 = vadd.f32 %v768, %v769
        %v771 = vrcp.pop %v770
        %v772 = vmul.f32 %v751, %v771
        %v773 = vmul.f32 %v753, %v771
        %v774 = vmul.f32 %v755, %v771
        %v775 = vmul.f32 %v757, %v771
        %v776 = vpack.c.bf16 %v773, %v772
        %v777 = vpack.c.bf16 %v775, %v774
        %v778 = vpack.c.bf16 %v648, %v645
        %v779 = vpack.c.bf16 %v656, %v653
        %780 = vxpose.xlu0.c.b16.start [1/8] %v776, 128
        %781 = vxpose.xlu0.c.b16.cont [2/8] %v777, 128
        %782 = vxpose.xlu0.c.b16.cont [3/8] 0, 128
        %783 = vxpose.xlu0.c.b16.cont [4/8] 0, 128
        %784 = vxpose.xlu0.c.b16.cont [5/8] 0, 128
        %785 = vxpose.xlu0.c.b16.cont [6/8] 0, 128
        %786 = vxpose.xlu0.c.b16.cont [7/8] 0, 128
        %787 = vxpose.xlu0.c.b16.end [8/8] 0, 128
        %v788 = vpop.trf.xlu0
        %v789 = vpop.trf.xlu0
        %v790 = vpop.trf.xlu0
        %v791 = vpop.trf.xlu0
        %v792 = vpop.trf.xlu0
        %v793 = vpop.trf.xlu0
        %v794 = vpop.trf.xlu0
        %v795 = vpop.trf.xlu0
        %v797 = vsel %vm511, %v788, 0
        %799 = vmatprep.subr.bf16.mxu0 0
        %800 = vmatpush1.bf16.msra.mxu0 0
        %801 = vmatprep.subr.bf16.mxu0 0
        %802 = vmatpush1.bf16.msra.mxu0 0
        %803 = vmatprep.subr.bf16.mxu0 0
        %804 = vmatpush1.bf16.msra.mxu0 0
        %805 = vmatprep.subr.bf16.mxu0 0
        %806 = vmatpush1.bf16.msra.mxu0 0
        %807 = vmatprep.subr.bf16.mxu0 0
        %808 = vmatpush1.bf16.msra.mxu0 0
        %809 = vmatprep.subr.bf16.mxu0 0
        %810 = vmatpush1.bf16.msra.mxu0 0
        %811 = vmatprep.subr.bf16.mxu0 0
        %812 = vmatpush1.bf16.msra.mxu0 %v779
        %813 = vmatprep.subr.bf16.mxu0 0
        %814 = vmatpush1.bf16.msra.mxu0 %v778
        %815 = vmatprep.subr.bf16.mxu0 0
        %816 = vmatpush2.bf16.msra.mxu0 0
        %817 = vmatprep.subr.bf16.mxu0 0
        %818 = vmatpush2.bf16.msra.mxu0 0
        %819 = vmatprep.subr.bf16.mxu0 0
        %820 = vmatpush2.bf16.msra.mxu0 0
        %821 = vmatprep.subr.bf16.mxu0 0
        %822 = vmatpush2.bf16.msra.mxu0 0
        %823 = vmatprep.subr.bf16.mxu0 0
        %824 = vmatpush2.bf16.msra.mxu0 0
        %825 = vmatprep.subr.bf16.mxu0 0
        %826 = vmatpush2.bf16.msra.mxu0 0
        %827 = vmatprep.subr.bf16.mxu0 0
        %828 = vmatpush2.bf16.msra.mxu0 0
        %829 = vmatprep.subr.bf16.mxu0 0
        %830 = vmatpush2.bf16.msra.mxu0 0
        %831 = vmatprep.mubr.bf16.mxu0 0
        %832 = vmatmul.mubr.bf16.gmra.mxu0 %v797
        %v833 = vpop.f32.mrf.mxu0
        %v834 = vadd.f32 0.0, %v833
        %v835 = vpop.f32.mrf.mxu0
        %v836 = vpop.f32.mrf.mxu0
        %v837 = vpop.f32.mrf.mxu0
        %838 = vdwg.mxu0
        %vm839 = vcmask 125952
        %840 = vst.msk [vmem:[%s308] sm:$0xf] %vm839, %v834
        %s841 = sand.u32 %s196, 1
        %s842 = scalar_lea.sflag [#allocation9], %s841
        %s843 = sand.u32 %s196, 1
        %s844 = smul.addr %s843, 4
        %s845 = scalar_lea.vmem [#allocation10], %s844
        // Predicated region
        $region53: #{tpu_custom_call.1} parent=47 // pred_check
          %p846 = pneg %p206
        $region54: #{tpu_custom_call.1} parent=47 // pred_check_branch
          %848 = sbr.rel (%p846) target = $region56
        $region55: #{tpu_custom_call.1} parent=47 // pred_region
          %s850 = ssub.s32 64, 64
          %851 = vsyncadd %s842, %s850
          %s852 = smul.addr %s36, 64
          %s853 = scalar_lea.hbm %s9, %s852
          %s855 = sshll.u32 %s845, 4
          %s856 = int_to_ptr.vmem [resolvable:$true] %s855
          %858 = dma.vmem_to_hbm [thread:$0]  %s856, 64, %s853, %s842
        $region56: #{tpu_custom_call.1} parent=47 // pred_fallthru
          _
      $region48: #{tpu_custom_call.1} parent=5 // pred_fallthru
        _
      %p859 = scmp.le.s32.totalorder 2, %s31
      // Predicated region
      $region57: #{tpu_custom_call.1} parent=5 // pred_check
        %p860 = pneg %p859
      $region58: #{tpu_custom_call.1} parent=5 // pred_check_branch
        %862 = sbr.rel (%p860) target = $region60
      $region59: #{tpu_custom_call.1} parent=5 // pred_region
        %s863 = ssub.s32 %s31, 2
        // Predicated region
        $region61: #{tpu_custom_call.1} parent=59 // pred_check
          %p864 = pneg %p212
        $region62: #{tpu_custom_call.1} parent=59 // pred_check_branch
          %866 = sbr.rel (%p864) target = $region64
        $region63: #{tpu_custom_call.1} parent=59 // pred_region
          %s867 = sand.u32 %s197, 1
          %s868 = scalar_lea.sflag [#allocation9], %s867
          %s869 = sand.u32 %s197, 1
          %s870 = smul.addr %s869, 4
          %s871 = scalar_lea.vmem [#allocation10], %s870
          %872 = dma.done %s868, 64
        $region64: #{tpu_custom_call.1} parent=59 // pred_fallthru
          _
      $region60: #{tpu_custom_call.1} parent=5 // pred_fallthru
        _
    $region6: #{tpu_custom_call.1} parent=1 // loop_footer
      %s35 = sadd.s32 1, %s31
    $region7: #{tpu_custom_call.1} parent=1 // loop_footer_branch
      %30 = sbr.rel target = $region3
    $region8: #{tpu_custom_call.1} parent=1 // loop_exit
      _
    %873 = vsyncpa [#allocation8], 1
    %s874 = scalar_lea.sflag [#allocation8], 1
    %875 = vsyncpa %s874, 1
    %876 = vsyncpa [#allocation9], 1
    %s877 = scalar_lea.sflag [#allocation9], 1
    %878 = vsyncpa %s877, 1

</llo_original>
